<compile_context>
chip_gen: v7x
topology: tpu7x:2x2x1
jax: 0.10.0
libtpu: 0.0.40
codegen_flags: <defaults>
</compile_context>

<pallas_src>
import functools
import math

import jax
import jax.numpy as jnp
from jax import lax
from jax.experimental import pallas as pl
from jax.experimental.pallas import tpu as pltpu

FREQ_DIM = 256          # frequency_embedding_size in TimeEmbedding
HALF = FREQ_DIM // 2    # 128 == one full lane width
PAD = 128               # lane-dense padded width for activations / mid dims

# packed small-matrix slot indices (per block)
W2T, WFC, WOUT = 0, 1, 2
# packed-vector row indices (per block)
B1, B2T, BFC, BOUT, GAMMA, BETA = 0, 1, 2, 3, 4, 5


def _silu(x):
    # x * sigmoid(x); sigmoid via the exact tanh identity -> one EUP op.
    return x * (0.5 * jnp.tanh(0.5 * x) + 0.5)


def simple_net_kernel(t_ref, freqs_ref, x_ref, w1_ref, wk_ref, vec_ref, o_ref,
                      *, d_ends, n_hidden):
    """Fused forward pass of all SimpleNet blocks.

    t_ref:    (B, 1)            f32 timesteps
    freqs_ref:(1, 128)          f32 sinusoidal frequencies
    x_ref:    (B, 128)          f32 zero-padded input (real dims first d_in cols)
    w1_ref:   (256, nb*128)     bf16 packed first time-MLP layers (all blocks)
    wk_ref:   (nb, 3, 128, 128) bf16 packed [w2t, wfc, wout] per block
    vec_ref:  (nb, 8, 128)      f32 packed bias / LN vectors (one tile per block)
    o_ref:    (B, 128)          f32 zero-padded output (real dims first d_out cols)
    """
    n_blocks = len(d_ends)

    # --- timestep embedding + batched first time-MLP layer (t-only work) -----
    args = t_ref[...] * freqs_ref[...]                                # (B, 128)
    emb = jnp.concatenate([jnp.cos(args), jnp.sin(args)], axis=-1)    # (B, 256)
    w1 = w1_ref[...].astype(jnp.float32)                              # (256, nb*128)
    h_all = jnp.dot(emb, w1, preferred_element_type=jnp.float32)      # (B, nb*128)

    # --- all alpha_i before the x-dependent chain (independent dots) ---------
    alphas = []
    for i in range(n_blocks):                     # static unroll (3 blocks)
        vecs = vec_ref[i]                         # (8, 128) one tile
        h = _silu(h_all[:, i * PAD:(i + 1) * PAD] + vecs[B1:B1 + 1])
        w2t = wk_ref[i, W2T].astype(jnp.float32)  # (128, 128)
        alphas.append(jnp.dot(h, w2t, preferred_element_type=jnp.float32)
                      + vecs[B2T:B2T + 1])        # pads exactly 0

    # --- serial x-dependent chain ---------------------------------------------
    x = x_ref[...]                                # (B, 128), zero beyond d_in
    lane = lax.broadcasted_iota(jnp.int32, (1, PAD), 1)
    for i in range(n_blocks):
        vecs = vec_ref[i]
        wfc = wk_ref[i, WFC].astype(jnp.float32)
        wout = wk_ref[i, WOUT].astype(jnp.float32)

        # TimeLinear: alpha * fc(x); block SiLU; Linear(mid, end)
        xfc = jnp.dot(x, wfc, preferred_element_type=jnp.float32) + vecs[BFC:BFC + 1]
        z = _silu(alphas[i] * xfc)
        y = jnp.dot(z, wout, preferred_element_type=jnp.float32) + vecs[BOUT:BOUT + 1]

        # LayerNorm + SiLU (hidden blocks only)
        if i < n_hidden:
            d = d_ends[i]
            inv_d = 1.0 / float(d)                # true feature dim, not 128
            mask = (lane < d).astype(jnp.float32)
            # Pad columns of y are exactly 0 (wout/bout pads are zero), so
            # sum(y)/d is the true mean.  Variance uses the two-pass
            # (y - mean)^2 form, masked so padded lanes never contribute.
            mean = jnp.sum(y, axis=-1, keepdims=True) * inv_d
            diff = (y - mean) * mask
            var = jnp.sum(diff * diff, axis=-1, keepdims=True) * inv_d
            y = diff * lax.rsqrt(var + 1e-5)
            y = y * vecs[GAMMA:GAMMA + 1] + vecs[BETA:BETA + 1]   # pads -> 0
            y = _silu(y)
        x = y                                     # padded lanes stay exactly 0

    o_ref[...] = x                                # lane-dense unmasked store


@functools.partial(jax.jit, static_argnames=("d_ends", "n_hidden", "dim_out"))
def simple_net_forward(x, t, w1, wk, v, *, d_ends, n_hidden, dim_out):
    B, d_in = x.shape
    x_pad = jnp.zeros((B, PAD), jnp.float32).at[:, :d_in].set(x.astype(jnp.float32))
    t2 = t.reshape(B, 1).astype(jnp.float32)
    freqs = jnp.exp(
        -math.log(10000.0) * jnp.arange(HALF, dtype=jnp.float32) / HALF
    ).reshape(1, HALF)

    vmem = pl.BlockSpec(memory_space=pltpu.MemorySpace.VMEM)
    y_pad = pl.pallas_call(
        functools.partial(simple_net_kernel, d_ends=d_ends, n_hidden=n_hidden),
        out_shape=jax.ShapeDtypeStruct((B, PAD), jnp.float32),
        in_specs=[vmem] * 6,
        out_specs=vmem,
    )(t2, freqs, x_pad, w1, wk, v)
    return y_pad[:, :dim_out]


def init_simple_net(key, dim_in, dim_out, dim_hids):
    """Deterministic synthetic parameters, packed into zero-padded slabs."""
    dims = [dim_in] + list(dim_hids) + [dim_out]
    nb = len(dims) - 1
    scale = 0.1
    w1 = jnp.zeros((FREQ_DIM, nb * PAD), jnp.float32)   # first time-MLP layer, all blocks
    wk = jnp.zeros((nb, 3, PAD, PAD), jnp.float32)      # [w2t, wfc, wout] per block
    v = jnp.zeros((nb, 8, PAD), jnp.float32)            # biases + LN vectors
    for i in range(nb):
        ds, de = dims[i], dims[i + 1]
        dm = max(ds, de) * 2
        key, k1, k2, k3, k4, k5, k6, k7, k8 = jax.random.split(key, 9)
        w1 = w1.at[:, i * PAD:i * PAD + dm].set(
            jax.random.normal(k1, (FREQ_DIM, dm), jnp.float32) * scale)
        wk = wk.at[i, W2T, :dm, :dm].set(
            jax.random.normal(k3, (dm, dm), jnp.float32) * scale)
        wk = wk.at[i, WFC, :ds, :dm].set(
            jax.random.normal(k5, (ds, dm), jnp.float32) * scale)
        wk = wk.at[i, WOUT, :dm, :de].set(
            jax.random.normal(k7, (dm, de), jnp.float32) * scale)
        v = v.at[i, B1, :dm].set(jax.random.normal(k2, (dm,), jnp.float32) * scale)
        v = v.at[i, B2T, :dm].set(jax.random.normal(k4, (dm,), jnp.float32) * scale)
        v = v.at[i, BFC, :dm].set(jax.random.normal(k6, (dm,), jnp.float32) * scale)
        v = v.at[i, BOUT, :de].set(jax.random.normal(k8, (de,), jnp.float32) * scale)
        if i < len(dim_hids):                    # LN only on hidden blocks
            v = v.at[i, GAMMA, :de].set(1.0)     # padded lanes stay 0; beta stays 0
    d_ends = tuple(dims[i + 1] for i in range(nb))
    # bf16 storage halves the weight DMA; the kernel upcasts in VMEM so the
    # dots remain f32-accurate (reference below uses the same bf16 values).
    return w1.astype(jnp.bfloat16), wk.astype(jnp.bfloat16), v, d_ends


def simple_net_reference(x, t, w1, wk, v, dims, n_hidden):
    """Pure-JAX reference on the un-padded sub-blocks (mirrors the torch module)."""
    B = x.shape[0]
    freqs = jnp.exp(-math.log(10000.0) * jnp.arange(HALF, dtype=jnp.float32) / HALF)
    args = t.reshape(B, 1).astype(jnp.float32) * freqs[None]
    emb = jnp.concatenate([jnp.cos(args), jnp.sin(args)], axis=-1)   # (B, 256)
    w1f = w1.astype(jnp.float32)
    wkf = wk.astype(jnp.float32)
    h = x.astype(jnp.float32)
    for i in range(len(dims) - 1):
        ds, de = dims[i], dims[i + 1]
        dm = max(ds, de) * 2
        w1_i = w1f[:, i * PAD:i * PAD + dm]
        tm = jax.nn.silu(emb @ w1_i + v[i, B1, :dm]) @ wkf[i, W2T, :dm, :dm] + v[i, B2T, :dm]
        z = jax.nn.silu(tm * (h @ wkf[i, WFC, :ds, :dm] + v[i, BFC, :dm]))
        y = z @ wkf[i, WOUT, :dm, :de] + v[i, BOUT, :de]
        if i < n_hidden:
            mean = jnp.mean(y, axis=-1, keepdims=True)
            var = jnp.mean((y - mean) ** 2, axis=-1, keepdims=True)
            y = (y - mean) / jnp.sqrt(var + 1e-5)
            y = y * v[i, GAMMA, :de] + v[i, BETA, :de]
            y = jax.nn.silu(y)
        h = y
    return h


if __name__ == "__main__":
    key = jax.random.PRNGKey(0)
    kx, kt, kp = jax.random.split(key, 3)

    B, dim_in, dim_out = 8, 2, 2
    dim_hids = [16, 16]
    num_timesteps = 50

    x = jax.random.normal(kx, (B, dim_in), jnp.float32)
    t = jax.random.randint(kt, (B,), 0, num_timesteps).astype(jnp.float32)

    w1, wk, v, d_ends = init_simple_net(kp, dim_in, dim_out, dim_hids)
    y = simple_net_forward(x, t, w1, wk, v, d_ends=d_ends,
                           n_hidden=len(dim_hids), dim_out=dim_out)
    jax.block_until_ready(y)
    assert y.shape == (B, dim_out)

    # correctness check against an un-padded pure-JAX reference (same bf16 weights)
    dims = [dim_in] + dim_hids + [dim_out]
    y_ref = simple_net_reference(x, t, w1, wk, v, dims, len(dim_hids))
    max_err = float(jnp.max(jnp.abs(y - y_ref)))
    assert max_err < 5e-3, f"mismatch vs reference: {max_err}"

    print("KERNEL_OK")
</pallas_src>

<mosaic_0001>
module attributes {stable_mosaic.version = 11 : i64} {
  func.func @simple_net_kernel(%arg0: memref<8x1xf32, #tpu.memory_space<vmem>>, %arg1: memref<1x128xf32, #tpu.memory_space<vmem>>, %arg2: memref<8x128xf32, #tpu.memory_space<vmem>>, %arg3: memref<256x384xbf16, #tpu.memory_space<vmem>>, %arg4: memref<3x3x128x128xbf16, #tpu.memory_space<vmem>>, %arg5: memref<3x8x128xf32, #tpu.memory_space<vmem>>, %arg6: memref<8x128xf32, #tpu.memory_space<vmem>>) attributes {dimension_semantics = [], scalar_prefetch = 0 : i64, scratch_operands = 0 : i64, tpu.core_type = #tpu.core_type<tc>} {
    %c0 = arith.constant 0 : index
    %c0_0 = arith.constant 0 : index
    %0 = vector.load %arg0[%c0, %c0_0] : memref<8x1xf32, #tpu.memory_space<vmem>>, vector<8x1xf32>
    %c0_1 = arith.constant 0 : index
    %c0_2 = arith.constant 0 : index
    %1 = vector.load %arg1[%c0_1, %c0_2] : memref<1x128xf32, #tpu.memory_space<vmem>>, vector<1x128xf32>
    %2 = vector.broadcast %0 : vector<8x1xf32> to vector<8x128xf32>
    %3 = vector.broadcast %1 : vector<1x128xf32> to vector<8x128xf32>
    %4 = arith.mulf %2, %3 : vector<8x128xf32>
    %5 = math.cos %4 : vector<8x128xf32>
    %6 = math.sin %4 : vector<8x128xf32>
    %7 = tpu.concatenate %5, %6 in 1 : vector<8x128xf32>, vector<8x128xf32> -> vector<8x256xf32>
    %c0_3 = arith.constant 0 : index
    %c0_4 = arith.constant 0 : index
    %8 = vector.load %arg3[%c0_3, %c0_4] : memref<256x384xbf16, #tpu.memory_space<vmem>>, vector<256x384xbf16>
    %9 = arith.extf %8 : vector<256x384xbf16> to vector<256x384xf32>
    %cst = arith.constant dense<0.000000e+00> : vector<8x384xf32>
    %10 = tpu.matmul %7, %9, %cst {dimension_numbers = #tpu.dot_dimension_numbers<[1], [0], [0], [1], [0, 0, 1, 1], [], []>} : vector<8x256xf32>, vector<256x384xf32>, vector<8x384xf32> -> vector<8x384xf32>
    %c0_5 = arith.constant 0 : index
    %c0_6 = arith.constant 0 : index
    %c0_7 = arith.constant 0 : index
    %11 = vector.load %arg5[%c0_5, %c0_6, %c0_7] : memref<3x8x128xf32, #tpu.memory_space<vmem>>, vector<1x8x128xf32>
    %12 = vector.shape_cast %11 : vector<1x8x128xf32> to vector<8x128xf32>
    %13 = vector.extract_strided_slice %10 {offsets = [0, 0], sizes = [8, 128], strides = [1, 1]} : vector<8x384xf32> to vector<8x128xf32>
    %14 = vector.extract_strided_slice %12 {offsets = [0, 0], sizes = [1, 128], strides = [1, 1]} : vector<8x128xf32> to vector<1x128xf32>
    %15 = vector.broadcast %14 : vector<1x128xf32> to vector<8x128xf32>
    %16 = arith.addf %13, %15 : vector<8x128xf32>
    %cst_8 = arith.constant 5.000000e-01 : f32
    %17 = vector.broadcast %cst_8 : f32 to vector<8x128xf32>
    %18 = arith.mulf %17, %16 : vector<8x128xf32>
    %19 = math.tanh %18 : vector<8x128xf32>
    %cst_9 = arith.constant 5.000000e-01 : f32
    %20 = vector.broadcast %cst_9 : f32 to vector<8x128xf32>
    %21 = arith.mulf %20, %19 : vector<8x128xf32>
    %cst_10 = arith.constant 5.000000e-01 : f32
    %22 = vector.broadcast %cst_10 : f32 to vector<8x128xf32>
    %23 = arith.addf %21, %22 : vector<8x128xf32>
    %24 = arith.mulf %16, %23 : vector<8x128xf32>
    %c0_11 = arith.constant 0 : index
    %c0_12 = arith.constant 0 : index
    %c0_13 = arith.constant 0 : index
    %c0_14 = arith.constant 0 : index
    %25 = vector.load %arg4[%c0_11, %c0_12, %c0_13, %c0_14] : memref<3x3x128x128xbf16, #tpu.memory_space<vmem>>, vector<1x1x128x128xbf16>
    %26 = vector.shape_cast %25 : vector<1x1x128x128xbf16> to vector<128x128xbf16>
    %27 = arith.extf %26 : vector<128x128xbf16> to vector<128x128xf32>
    %cst_15 = arith.constant dense<0.000000e+00> : vector<8x128xf32>
    %28 = tpu.matmul %24, %27, %cst_15 {dimension_numbers = #tpu.dot_dimension_numbers<[1], [0], [0], [1], [0, 0, 1, 1], [], []>} : vector<8x128xf32>, vector<128x128xf32>, vector<8x128xf32> -> vector<8x128xf32>
    %29 = vector.extract_strided_slice %12 {offsets = [1, 0], sizes = [1, 128], strides = [1, 1]} : vector<8x128xf32> to vector<1x128xf32>
    %30 = vector.broadcast %29 : vector<1x128xf32> to vector<8x128xf32>
    %31 = arith.addf %28, %30 : vector<8x128xf32>
    %c1 = arith.constant 1 : index
    %c0_16 = arith.constant 0 : index
    %c0_17 = arith.constant 0 : index
    %32 = vector.load %arg5[%c1, %c0_16, %c0_17] : memref<3x8x128xf32, #tpu.memory_space<vmem>>, vector<1x8x128xf32>
    %33 = vector.shape_cast %32 : vector<1x8x128xf32> to vector<8x128xf32>
    %34 = vector.extract_strided_slice %10 {offsets = [0, 128], sizes = [8, 128], strides = [1, 1]} : vector<8x384xf32> to vector<8x128xf32>
    %35 = vector.extract_strided_slice %33 {offsets = [0, 0], sizes = [1, 128], strides = [1, 1]} : vector<8x128xf32> to vector<1x128xf32>
    %36 = vector.broadcast %35 : vector<1x128xf32> to vector<8x128xf32>
    %37 = arith.addf %34, %36 : vector<8x128xf32>
    %cst_18 = arith.constant 5.000000e-01 : f32
    %38 = vector.broadcast %cst_18 : f32 to vector<8x128xf32>
    %39 = arith.mulf %38, %37 : vector<8x128xf32>
    %40 = math.tanh %39 : vector<8x128xf32>
    %cst_19 = arith.constant 5.000000e-01 : f32
    %41 = vector.broadcast %cst_19 : f32 to vector<8x128xf32>
    %42 = arith.mulf %41, %40 : vector<8x128xf32>
    %cst_20 = arith.constant 5.000000e-01 : f32
    %43 = vector.broadcast %cst_20 : f32 to vector<8x128xf32>
    %44 = arith.addf %42, %43 : vector<8x128xf32>
    %45 = arith.mulf %37, %44 : vector<8x128xf32>
    %c1_21 = arith.constant 1 : index
    %c0_22 = arith.constant 0 : index
    %c0_23 = arith.constant 0 : index
    %c0_24 = arith.constant 0 : index
    %46 = vector.load %arg4[%c1_21, %c0_22, %c0_23, %c0_24] : memref<3x3x128x128xbf16, #tpu.memory_space<vmem>>, vector<1x1x128x128xbf16>
    %47 = vector.shape_cast %46 : vector<1x1x128x128xbf16> to vector<128x128xbf16>
    %48 = arith.extf %47 : vector<128x128xbf16> to vector<128x128xf32>
    %cst_25 = arith.constant dense<0.000000e+00> : vector<8x128xf32>
    %49 = tpu.matmul %45, %48, %cst_25 {dimension_numbers = #tpu.dot_dimension_numbers<[1], [0], [0], [1], [0, 0, 1, 1], [], []>} : vector<8x128xf32>, vector<128x128xf32>, vector<8x128xf32> -> vector<8x128xf32>
    %50 = vector.extract_strided_slice %33 {offsets = [1, 0], sizes = [1, 128], strides = [1, 1]} : vector<8x128xf32> to vector<1x128xf32>
    %51 = vector.broadcast %50 : vector<1x128xf32> to vector<8x128xf32>
    %52 = arith.addf %49, %51 : vector<8x128xf32>
    %c2 = arith.constant 2 : index
    %c0_26 = arith.constant 0 : index
    %c0_27 = arith.constant 0 : index
    %53 = vector.load %arg5[%c2, %c0_26, %c0_27] : memref<3x8x128xf32, #tpu.memory_space<vmem>>, vector<1x8x128xf32>
    %54 = vector.shape_cast %53 : vector<1x8x128xf32> to vector<8x128xf32>
    %55 = vector.extract_strided_slice %10 {offsets = [0, 256], sizes = [8, 128], strides = [1, 1]} : vector<8x384xf32> to vector<8x128xf32>
    %56 = vector.extract_strided_slice %54 {offsets = [0, 0], sizes = [1, 128], strides = [1, 1]} : vector<8x128xf32> to vector<1x128xf32>
    %57 = vector.broadcast %56 : vector<1x128xf32> to vector<8x128xf32>
    %58 = arith.addf %55, %57 : vector<8x128xf32>
    %cst_28 = arith.constant 5.000000e-01 : f32
    %59 = vector.broadcast %cst_28 : f32 to vector<8x128xf32>
    %60 = arith.mulf %59, %58 : vector<8x128xf32>
    %61 = math.tanh %60 : vector<8x128xf32>
    %cst_29 = arith.constant 5.000000e-01 : f32
    %62 = vector.broadcast %cst_29 : f32 to vector<8x128xf32>
    %63 = arith.mulf %62, %61 : vector<8x128xf32>
    %cst_30 = arith.constant 5.000000e-01 : f32
    %64 = vector.broadcast %cst_30 : f32 to vector<8x128xf32>
    %65 = arith.addf %63, %64 : vector<8x128xf32>
    %66 = arith.mulf %58, %65 : vector<8x128xf32>
    %c2_31 = arith.constant 2 : index
    %c0_32 = arith.constant 0 : index
    %c0_33 = arith.constant 0 : index
    %c0_34 = arith.constant 0 : index
    %67 = vector.load %arg4[%c2_31, %c0_32, %c0_33, %c0_34] : memref<3x3x128x128xbf16, #tpu.memory_space<vmem>>, vector<1x1x128x128xbf16>
    %68 = vector.shape_cast %67 : vector<1x1x128x128xbf16> to vector<128x128xbf16>
    %69 = arith.extf %68 : vector<128x128xbf16> to vector<128x128xf32>
    %cst_35 = arith.constant dense<0.000000e+00> : vector<8x128xf32>
    %70 = tpu.matmul %66, %69, %cst_35 {dimension_numbers = #tpu.dot_dimension_numbers<[1], [0], [0], [1], [0, 0, 1, 1], [], []>} : vector<8x128xf32>, vector<128x128xf32>, vector<8x128xf32> -> vector<8x128xf32>
    %71 = vector.extract_strided_slice %54 {offsets = [1, 0], sizes = [1, 128], strides = [1, 1]} : vector<8x128xf32> to vector<1x128xf32>
    %72 = vector.broadcast %71 : vector<1x128xf32> to vector<8x128xf32>
    %73 = arith.addf %70, %72 : vector<8x128xf32>
    %c0_36 = arith.constant 0 : index
    %c0_37 = arith.constant 0 : index
    %74 = vector.load %arg2[%c0_36, %c0_37] : memref<8x128xf32, #tpu.memory_space<vmem>>, vector<8x128xf32>
    %75 = tpu.iota {dimensions = array<i32: 1>} : vector<1x128xi32>
    %c0_38 = arith.constant 0 : index
    %c0_39 = arith.constant 0 : index
    %c0_40 = arith.constant 0 : index
    %76 = vector.load %arg5[%c0_38, %c0_39, %c0_40] : memref<3x8x128xf32, #tpu.memory_space<vmem>>, vector<1x8x128xf32>
    %77 = vector.shape_cast %76 : vector<1x8x128xf32> to vector<8x128xf32>
    %c0_41 = arith.constant 0 : index
    %c1_42 = arith.constant 1 : index
    %c0_43 = arith.constant 0 : index
    %c0_44 = arith.constant 0 : index
    %78 = vector.load %arg4[%c0_41, %c1_42, %c0_43, %c0_44] : memref<3x3x128x128xbf16, #tpu.memory_space<vmem>>, vector<1x1x128x128xbf16>
    %79 = vector.shape_cast %78 : vector<1x1x128x128xbf16> to vector<128x128xbf16>
    %80 = arith.extf %79 : vector<128x128xbf16> to vector<128x128xf32>
    %c0_45 = arith.constant 0 : index
    %c2_46 = arith.constant 2 : index
    %c0_47 = arith.constant 0 : index
    %c0_48 = arith.constant 0 : index
    %81 = vector.load %arg4[%c0_45, %c2_46, %c0_47, %c0_48] : memref<3x3x128x128xbf16, #tpu.memory_space<vmem>>, vector<1x1x128x128xbf16>
    %82 = vector.shape_cast %81 : vector<1x1x128x128xbf16> to vector<128x128xbf16>
    %83 = arith.extf %82 : vector<128x128xbf16> to vector<128x128xf32>
    %cst_49 = arith.constant dense<0.000000e+00> : vector<8x128xf32>
    %84 = tpu.matmul %74, %80, %cst_49 {dimension_numbers = #tpu.dot_dimension_numbers<[1], [0], [0], [1], [0, 0, 1, 1], [], []>} : vector<8x128xf32>, vector<128x128xf32>, vector<8x128xf32> -> vector<8x128xf32>
    %85 = vector.extract_strided_slice %77 {offsets = [2, 0], sizes = [1, 128], strides = [1, 1]} : vector<8x128xf32> to vector<1x128xf32>
    %86 = vector.broadcast %85 : vector<1x128xf32> to vector<8x128xf32>
    %87 = arith.addf %84, %86 : vector<8x128xf32>
    %88 = arith.mulf %31, %87 : vector<8x128xf32>
    %cst_50 = arith.constant 5.000000e-01 : f32
    %89 = vector.broadcast %cst_50 : f32 to vector<8x128xf32>
    %90 = arith.mulf %89, %88 : vector<8x128xf32>
    %91 = math.tanh %90 : vector<8x128xf32>
    %cst_51 = arith.constant 5.000000e-01 : f32
    %92 = vector.broadcast %cst_51 : f32 to vector<8x128xf32>
    %93 = arith.mulf %92, %91 : vector<8x128xf32>
    %cst_52 = arith.constant 5.000000e-01 : f32
    %94 = vector.broadcast %cst_52 : f32 to vector<8x128xf32>
    %95 = arith.addf %93, %94 : vector<8x128xf32>
    %96 = arith.mulf %88, %95 : vector<8x128xf32>
    %cst_53 = arith.constant dense<0.000000e+00> : vector<8x128xf32>
    %97 = tpu.matmul %96, %83, %cst_53 {dimension_numbers = #tpu.dot_dimension_numbers<[1], [0], [0], [1], [0, 0, 1, 1], [], []>} : vector<8x128xf32>, vector<128x128xf32>, vector<8x128xf32> -> vector<8x128xf32>
    %98 = vector.extract_strided_slice %77 {offsets = [3, 0], sizes = [1, 128], strides = [1, 1]} : vector<8x128xf32> to vector<1x128xf32>
    %99 = vector.broadcast %98 : vector<1x128xf32> to vector<8x128xf32>
    %100 = arith.addf %97, %99 : vector<8x128xf32>
    %c16_i32 = arith.constant 16 : i32
    %101 = vector.broadcast %c16_i32 : i32 to vector<1x128xi32>
    %102 = arith.cmpi slt, %75, %101 : vector<1x128xi32>
    %103 = arith.extui %102 : vector<1x128xi1> to vector<1x128xi32>
    %104 = arith.sitofp %103 : vector<1x128xi32> to vector<1x128xf32>
    %cst_54 = arith.constant dense<0.000000e+00> : vector<8xf32>
    %105 = vector.multi_reduction <add>, %100, %cst_54 [1] : vector<8x128xf32> to vector<8xf32>
    %106 = vector.shape_cast %105 : vector<8xf32> to vector<8x1xf32>
    %cst_55 = arith.constant 6.250000e-02 : f32
    %107 = vector.broadcast %cst_55 : f32 to vector<8x1xf32>
    %108 = arith.mulf %106, %107 : vector<8x1xf32>
    %109 = vector.broadcast %108 : vector<8x1xf32> to vector<8x128xf32>
    %110 = arith.subf %100, %109 : vector<8x128xf32>
    %111 = vector.broadcast %104 : vector<1x128xf32> to vector<8x128xf32>
    %112 = arith.mulf %110, %111 : vector<8x128xf32>
    %113 = arith.mulf %112, %112 : vector<8x128xf32>
    %cst_56 = arith.constant dense<0.000000e+00> : vector<8xf32>
    %114 = vector.multi_reduction <add>, %113, %cst_56 [1] : vector<8x128xf32> to vector<8xf32>
    %115 = vector.shape_cast %114 : vector<8xf32> to vector<8x1xf32>
    %cst_57 = arith.constant 6.250000e-02 : f32
    %116 = vector.broadcast %cst_57 : f32 to vector<8x1xf32>
    %117 = arith.mulf %115, %116 : vector<8x1xf32>
    %cst_58 = arith.constant 9.99999974E-6 : f32
    %118 = vector.broadcast %cst_58 : f32 to vector<8x1xf32>
    %119 = arith.addf %117, %118 : vector<8x1xf32>
    %120 = math.rsqrt %119 : vector<8x1xf32>
    %121 = vector.broadcast %120 : vector<8x1xf32> to vector<8x128xf32>
    %122 = arith.mulf %112, %121 : vector<8x128xf32>
    %123 = vector.extract_strided_slice %77 {offsets = [4, 0], sizes = [1, 128], strides = [1, 1]} : vector<8x128xf32> to vector<1x128xf32>
    %124 = vector.broadcast %123 : vector<1x128xf32> to vector<8x128xf32>
    %125 = arith.mulf %122, %124 : vector<8x128xf32>
    %126 = vector.extract_strided_slice %77 {offsets = [5, 0], sizes = [1, 128], strides = [1, 1]} : vector<8x128xf32> to vector<1x128xf32>
    %127 = vector.broadcast %126 : vector<1x128xf32> to vector<8x128xf32>
    %128 = arith.addf %125, %127 : vector<8x128xf32>
    %cst_59 = arith.constant 5.000000e-01 : f32
    %129 = vector.broadcast %cst_59 : f32 to vector<8x128xf32>
    %130 = arith.mulf %129, %128 : vector<8x128xf32>
    %131 = math.tanh %130 : vector<8x128xf32>
    %cst_60 = arith.constant 5.000000e-01 : f32
    %132 = vector.broadcast %cst_60 : f32 to vector<8x128xf32>
    %133 = arith.mulf %132, %131 : vector<8x128xf32>
    %cst_61 = arith.constant 5.000000e-01 : f32
    %134 = vector.broadcast %cst_61 : f32 to vector<8x128xf32>
    %135 = arith.addf %133, %134 : vector<8x128xf32>
    %136 = arith.mulf %128, %135 : vector<8x128xf32>
    %c1_62 = arith.constant 1 : index
    %c0_63 = arith.constant 0 : index
    %c0_64 = arith.constant 0 : index
    %137 = vector.load %arg5[%c1_62, %c0_63, %c0_64] : memref<3x8x128xf32, #tpu.memory_space<vmem>>, vector<1x8x128xf32>
    %138 = vector.shape_cast %137 : vector<1x8x128xf32> to vector<8x128xf32>
    %c1_65 = arith.constant 1 : index
    %c1_66 = arith.constant 1 : index
    %c0_67 = arith.constant 0 : index
    %c0_68 = arith.constant 0 : index
    %139 = vector.load %arg4[%c1_65, %c1_66, %c0_67, %c0_68] : memref<3x3x128x128xbf16, #tpu.memory_space<vmem>>, vector<1x1x128x128xbf16>
    %140 = vector.shape_cast %139 : vector<1x1x128x128xbf16> to vector<128x128xbf16>
    %141 = arith.extf %140 : vector<128x128xbf16> to vector<128x128xf32>
    %c1_69 = arith.constant 1 : index
    %c2_70 = arith.constant 2 : index
    %c0_71 = arith.constant 0 : index
    %c0_72 = arith.constant 0 : index
    %142 = vector.load %arg4[%c1_69, %c2_70, %c0_71, %c0_72] : memref<3x3x128x128xbf16, #tpu.memory_space<vmem>>, vector<1x1x128x128xbf16>
    %143 = vector.shape_cast %142 : vector<1x1x128x128xbf16> to vector<128x128xbf16>
    %144 = arith.extf %143 : vector<128x128xbf16> to vector<128x128xf32>
    %cst_73 = arith.constant dense<0.000000e+00> : vector<8x128xf32>
    %145 = tpu.matmul %136, %141, %cst_73 {dimension_numbers = #tpu.dot_dimension_numbers<[1], [0], [0], [1], [0, 0, 1, 1], [], []>} : vector<8x128xf32>, vector<128x128xf32>, vector<8x128xf32> -> vector<8x128xf32>
    %146 = vector.extract_strided_slice %138 {offsets = [2, 0], sizes = [1, 128], strides = [1, 1]} : vector<8x128xf32> to vector<1x128xf32>
    %147 = vector.broadcast %146 : vector<1x128xf32> to vector<8x128xf32>
    %148 = arith.addf %145, %147 : vector<8x128xf32>
    %149 = arith.mulf %52, %148 : vector<8x128xf32>
    %cst_74 = arith.constant 5.000000e-01 : f32
    %150 = vector.broadcast %cst_74 : f32 to vector<8x128xf32>
    %151 = arith.mulf %150, %149 : vector<8x128xf32>
    %152 = math.tanh %151 : vector<8x128xf32>
    %cst_75 = arith.constant 5.000000e-01 : f32
    %153 = vector.broadcast %cst_75 : f32 to vector<8x128xf32>
    %154 = arith.mulf %153, %152 : vector<8x128xf32>
    %cst_76 = arith.constant 5.000000e-01 : f32
    %155 = vector.broadcast %cst_76 : f32 to vector<8x128xf32>
    %156 = arith.addf %154, %155 : vector<8x128xf32>
    %157 = arith.mulf %149, %156 : vector<8x128xf32>
    %cst_77 = arith.constant dense<0.000000e+00> : vector<8x128xf32>
    %158 = tpu.matmul %157, %144, %cst_77 {dimension_numbers = #tpu.dot_dimension_numbers<[1], [0], [0], [1], [0, 0, 1, 1], [], []>} : vector<8x128xf32>, vector<128x128xf32>, vector<8x128xf32> -> vector<8x128xf32>
    %159 = vector.extract_strided_slice %138 {offsets = [3, 0], sizes = [1, 128], strides = [1, 1]} : vector<8x128xf32> to vector<1x128xf32>
    %160 = vector.broadcast %159 : vector<1x128xf32> to vector<8x128xf32>
    %161 = arith.addf %158, %160 : vector<8x128xf32>
    %c16_i32_78 = arith.constant 16 : i32
    %162 = vector.broadcast %c16_i32_78 : i32 to vector<1x128xi32>
    %163 = arith.cmpi slt, %75, %162 : vector<1x128xi32>
    %164 = arith.extui %163 : vector<1x128xi1> to vector<1x128xi32>
    %165 = arith.sitofp %164 : vector<1x128xi32> to vector<1x128xf32>
    %cst_79 = arith.constant dense<0.000000e+00> : vector<8xf32>
    %166 = vector.multi_reduction <add>, %161, %cst_79 [1] : vector<8x128xf32> to vector<8xf32>
    %167 = vector.shape_cast %166 : vector<8xf32> to vector<8x1xf32>
    %cst_80 = arith.constant 6.250000e-02 : f32
    %168 = vector.broadcast %cst_80 : f32 to vector<8x1xf32>
    %169 = arith.mulf %167, %168 : vector<8x1xf32>
    %170 = vector.broadcast %169 : vector<8x1xf32> to vector<8x128xf32>
    %171 = arith.subf %161, %170 : vector<8x128xf32>
    %172 = vector.broadcast %165 : vector<1x128xf32> to vector<8x128xf32>
    %173 = arith.mulf %171, %172 : vector<8x128xf32>
    %174 = arith.mulf %173, %173 : vector<8x128xf32>
    %cst_81 = arith.constant dense<0.000000e+00> : vector<8xf32>
    %175 = vector.multi_reduction <add>, %174, %cst_81 [1] : vector<8x128xf32> to vector<8xf32>
    %176 = vector.shape_cast %175 : vector<8xf32> to vector<8x1xf32>
    %cst_82 = arith.constant 6.250000e-02 : f32
    %177 = vector.broadcast %cst_82 : f32 to vector<8x1xf32>
    %178 = arith.mulf %176, %177 : vector<8x1xf32>
    %cst_83 = arith.constant 9.99999974E-6 : f32
    %179 = vector.broadcast %cst_83 : f32 to vector<8x1xf32>
    %180 = arith.addf %178, %179 : vector<8x1xf32>
    %181 = math.rsqrt %180 : vector<8x1xf32>
    %182 = vector.broadcast %181 : vector<8x1xf32> to vector<8x128xf32>
    %183 = arith.mulf %173, %182 : vector<8x128xf32>
    %184 = vector.extract_strided_slice %138 {offsets = [4, 0], sizes = [1, 128], strides = [1, 1]} : vector<8x128xf32> to vector<1x128xf32>
    %185 = vector.broadcast %184 : vector<1x128xf32> to vector<8x128xf32>
    %186 = arith.mulf %183, %185 : vector<8x128xf32>
    %187 = vector.extract_strided_slice %138 {offsets = [5, 0], sizes = [1, 128], strides = [1, 1]} : vector<8x128xf32> to vector<1x128xf32>
    %188 = vector.broadcast %187 : vector<1x128xf32> to vector<8x128xf32>
    %189 = arith.addf %186, %188 : vector<8x128xf32>
    %cst_84 = arith.constant 5.000000e-01 : f32
    %190 = vector.broadcast %cst_84 : f32 to vector<8x128xf32>
    %191 = arith.mulf %190, %189 : vector<8x128xf32>
    %192 = math.tanh %191 : vector<8x128xf32>
    %cst_85 = arith.constant 5.000000e-01 : f32
    %193 = vector.broadcast %cst_85 : f32 to vector<8x128xf32>
    %194 = arith.mulf %193, %192 : vector<8x128xf32>
    %cst_86 = arith.constant 5.000000e-01 : f32
    %195 = vector.broadcast %cst_86 : f32 to vector<8x128xf32>
    %196 = arith.addf %194, %195 : vector<8x128xf32>
    %197 = arith.mulf %189, %196 : vector<8x128xf32>
    %c2_87 = arith.constant 2 : index
    %c0_88 = arith.constant 0 : index
    %c0_89 = arith.constant 0 : index
    %198 = vector.load %arg5[%c2_87, %c0_88, %c0_89] : memref<3x8x128xf32, #tpu.memory_space<vmem>>, vector<1x8x128xf32>
    %199 = vector.shape_cast %198 : vector<1x8x128xf32> to vector<8x128xf32>
    %c2_90 = arith.constant 2 : index
    %c1_91 = arith.constant 1 : index
    %c0_92 = arith.constant 0 : index
    %c0_93 = arith.constant 0 : index
    %200 = vector.load %arg4[%c2_90, %c1_91, %c0_92, %c0_93] : memref<3x3x128x128xbf16, #tpu.memory_space<vmem>>, vector<1x1x128x128xbf16>
    %201 = vector.shape_cast %200 : vector<1x1x128x128xbf16> to vector<128x128xbf16>
    %202 = arith.extf %201 : vector<128x128xbf16> to vector<128x128xf32>
    %c2_94 = arith.constant 2 : index
    %c2_95 = arith.constant 2 : index
    %c0_96 = arith.constant 0 : index
    %c0_97 = arith.constant 0 : index
    %203 = vector.load %arg4[%c2_94, %c2_95, %c0_96, %c0_97] : memref<3x3x128x128xbf16, #tpu.memory_space<vmem>>, vector<1x1x128x128xbf16>
    %204 = vector.shape_cast %203 : vector<1x1x128x128xbf16> to vector<128x128xbf16>
    %205 = arith.extf %204 : vector<128x128xbf16> to vector<128x128xf32>
    %cst_98 = arith.constant dense<0.000000e+00> : vector<8x128xf32>
    %206 = tpu.matmul %197, %202, %cst_98 {dimension_numbers = #tpu.dot_dimension_numbers<[1], [0], [0], [1], [0, 0, 1, 1], [], []>} : vector<8x128xf32>, vector<128x128xf32>, vector<8x128xf32> -> vector<8x128xf32>
    %207 = vector.extract_strided_slice %199 {offsets = [2, 0], sizes = [1, 128], strides = [1, 1]} : vector<8x128xf32> to vector<1x128xf32>
    %208 = vector.broadcast %207 : vector<1x128xf32> to vector<8x128xf32>
    %209 = arith.addf %206, %208 : vector<8x128xf32>
    %210 = arith.mulf %73, %209 : vector<8x128xf32>
    %cst_99 = arith.constant 5.000000e-01 : f32
    %211 = vector.broadcast %cst_99 : f32 to vector<8x128xf32>
    %212 = arith.mulf %211, %210 : vector<8x128xf32>
    %213 = math.tanh %212 : vector<8x128xf32>
    %cst_100 = arith.constant 5.000000e-01 : f32
    %214 = vector.broadcast %cst_100 : f32 to vector<8x128xf32>
    %215 = arith.mulf %214, %213 : vector<8x128xf32>
    %cst_101 = arith.constant 5.000000e-01 : f32
    %216 = vector.broadcast %cst_101 : f32 to vector<8x128xf32>
    %217 = arith.addf %215, %216 : vector<8x128xf32>
    %218 = arith.mulf %210, %217 : vector<8x128xf32>
    %cst_102 = arith.constant dense<0.000000e+00> : vector<8x128xf32>
    %219 = tpu.matmul %218, %205, %cst_102 {dimension_numbers = #tpu.dot_dimension_numbers<[1], [0], [0], [1], [0, 0, 1, 1], [], []>} : vector<8x128xf32>, vector<128x128xf32>, vector<8x128xf32> -> vector<8x128xf32>
    %220 = vector.extract_strided_slice %199 {offsets = [3, 0], sizes = [1, 128], strides = [1, 1]} : vector<8x128xf32> to vector<1x128xf32>
    %221 = vector.broadcast %220 : vector<1x128xf32> to vector<8x128xf32>
    %222 = arith.addf %219, %221 : vector<8x128xf32>
    %c0_103 = arith.constant 0 : index
    %c0_104 = arith.constant 0 : index
    %223 = vector.load %arg6[%c0_103, %c0_104] : memref<8x128xf32, #tpu.memory_space<vmem>>, vector<8x128xf32>
    tpu.vector_store %arg6[%c0_103, %c0_104], %222 {strides = array<i32>} : memref<8x128xf32, #tpu.memory_space<vmem>>, vector<8x128xf32>,
    return
  }
}

</mosaic_0001>

<llo_original>
// kernel: simple_net_forward.1
$region0: #{simple_net_forward.1}
  #allocation0 [shape = 'u32[]', space=smem, size = 0x4, offset = 0x4, fixed_abs, tag = 'smem constant byte address 0x4 - core index']
  #allocation1 [shape = 'u32[144,128]{1,0:T(1,128)}', space=vmem, size = 0x12000, scoped, tag = 'internal scratch']
  %s0 = inlined_call_operand.vmem [shape: f32[8,1], index: 0, kind: input, shape index: {}]
  %s1 = inlined_call_operand.vmem [shape: f32[1,128], index: 1, kind: input, shape index: {}]
  %s2 = inlined_call_operand.vmem [shape: f32[8,128], index: 2, kind: input, shape index: {}]
  %s3 = inlined_call_operand.hbm [shape: bf16[256,384], index: 3, kind: input, shape index: {}]
  %s4 = inlined_call_operand.hbm [shape: bf16[3,3,128,128], index: 4, kind: input, shape index: {}]
  %s5 = inlined_call_operand.vmem [shape: f32[3,8,128], index: 5, kind: input, shape index: {}]
  %s6 = inlined_call_operand.vmem [shape: f32[8,128], index: 6, kind: output, shape index: {}]
  %s7 = sld [smem:[#allocation0]]
  $region42: #{simple_net_forward.1} parent=0
    _
  %s9 = ssub.s32 1, %s7
  %s10 = scalar_select 0, %s9, %s7
  $region1: #{simple_net_forward.1} parent=0
    #allocation2 [shape = 'u8[196608]{0}', space=vmem, size = 0x30000, scoped, tag = 'input window, operand 3, single buffered']
    #allocation3 [shape = 's32[1]{0}', space=sflag, size = 0x4, scoped, tag = 'scoped memory for simple_net_forward.1']
    #allocation4 [shape = 'u8[294912]{0}', space=vmem, size = 0x48000, scoped, tag = 'input window, operand 4, single buffered']
    #allocation5 [shape = 's32[1]{0}', space=sflag, size = 0x4, scoped, tag = 'scoped memory for simple_net_forward.1']
    %11 = vsyncpa [#allocation3], 0
    %12 = vsyncpa [#allocation5], 0
    // Predicated region
    $region2: #{simple_net_forward.1} parent=1 // pred_check
      _
    $region3: #{simple_net_forward.1} parent=1 // pred_check_branch
      %14 = sbr.rel (0) target = $region5
    $region4: #{simple_net_forward.1} parent=1 // pred_region
      _
    $region5: #{simple_net_forward.1} parent=1 // pred_fallthru
      _
    // Predicated region
    $region6: #{simple_net_forward.1} parent=1 // pred_check
      _
    $region7: #{simple_net_forward.1} parent=1 // pred_check_branch
      %16 = sbr.rel (0) target = $region9
    $region8: #{simple_net_forward.1} parent=1 // pred_region
      _
    $region9: #{simple_net_forward.1} parent=1 // pred_fallthru
      _
    // Predicated region
    $region10: #{simple_net_forward.1} parent=1 // pred_check
      _
    $region11: #{simple_net_forward.1} parent=1 // pred_check_branch
      %18 = sbr.rel (0) target = $region13
    $region12: #{simple_net_forward.1} parent=1 // pred_region
      _
    $region13: #{simple_net_forward.1} parent=1 // pred_fallthru
      _
    // Predicated region
    $region14: #{simple_net_forward.1} parent=1 // pred_check
      _
    $region15: #{simple_net_forward.1} parent=1 // pred_check_branch
      %20 = sbr.rel (0) target = $region17
    $region16: #{simple_net_forward.1} parent=1 // pred_region
      %s22 = ssub.s32 6144, 6144
      %23 = vsyncadd [#allocation3], %s22
      %s24 = sshll.u32 [#allocation2], 4
      %s25 = int_to_ptr.vmem [resolvable:$true] %s24
      %30 = dma.hbm_to_vmem [thread:$0]  %s3, 6144, %s25, [#allocation3], 192, 192, 12
    $region17: #{simple_net_forward.1} parent=1 // pred_fallthru
      _
    // Predicated region
    $region18: #{simple_net_forward.1} parent=1 // pred_check
      _
    $region19: #{simple_net_forward.1} parent=1 // pred_check_branch
      %32 = sbr.rel (0) target = $region21
    $region20: #{simple_net_forward.1} parent=1 // pred_region
      %s34 = ssub.s32 9216, 9216
      %35 = vsyncadd [#allocation5], %s34
      %s36 = sshll.u32 [#allocation4], 4
      %s37 = int_to_ptr.vmem [resolvable:$true] %s36
      %42 = dma.hbm_to_vmem [thread:$0]  %s4, 9216, %s37, [#allocation5], 64, 64, 4
    $region21: #{simple_net_forward.1} parent=1 // pred_fallthru
      _
    // Predicated region
    $region22: #{simple_net_forward.1} parent=1 // pred_check
      _
    $region23: #{simple_net_forward.1} parent=1 // pred_check_branch
      %44 = sbr.rel (0) target = $region25
    $region24: #{simple_net_forward.1} parent=1 // pred_region
      _
    $region25: #{simple_net_forward.1} parent=1 // pred_fallthru
      _
    // Predicated region
    $region26: #{simple_net_forward.1} parent=1 // pred_check
      _
    $region27: #{simple_net_forward.1} parent=1 // pred_check_branch
      %46 = sbr.rel (0) target = $region29
    $region28: #{simple_net_forward.1} parent=1 // pred_region
      %47 = dma.done [#allocation3], 6144
    $region29: #{simple_net_forward.1} parent=1 // pred_fallthru
      _
    // Predicated region
    $region30: #{simple_net_forward.1} parent=1 // pred_check
      _
    $region31: #{simple_net_forward.1} parent=1 // pred_check_branch
      %49 = sbr.rel (0) target = $region33
    $region32: #{simple_net_forward.1} parent=1 // pred_region
      %50 = dma.done [#allocation5], 9216
    $region33: #{simple_net_forward.1} parent=1 // pred_fallthru
      _
    %v51 = vld [vmem:[%s0] sm:$0xff]
    %v52 = vld [vmem:[%s1] sm:$0x1]
    %54 = vset.pattern.permute.xlu0 0
    %55 = vperm.xlu0 %54, %v51
    %v56 = vpop.permute.xlu0 %55
    %v59 = vlaneseq
    %v60 = vshrl.u32 %v59, 7
    %v61 = vsub.s32 0, %v60
    %v62 = vrot.slane %v52, %v61
    %v64 = vmul.f32 %v56, %v62
    %v65 = vand.u32 2147483647, %v64
    %vm66 = vcmp.le.f32.partialorder %v65, 0.7853982
    %vm67 = vcmp.lt.s32.totalorder %v64, 0
    %v68 = vand.u32 %v64, 2139095040
    %v69 = vshrl.u32 %v68, 23
    %v70 = vsub.s32 %v69, 127
    %v71 = vand.u32 2147483647, %v64
    %v72 = vand.u32 %v71, 8388607
    %v73 = vor.u32 %v72, 8388608
    %v74 = vsub.s32 0, %v73
    %v75 = vadd.s32 %v70, 1
    %vm76 = vcmp.gt.s32.totalorder %v75, 0
    %v77 = vsel %vm76, %v75, 0
    %v78 = vshrl.u32 %v77, 5
    %v79 = vand.u32 %v77, 31
    %v80 = vsub.s32 32, %v79
    %v81 = vshrl.u32 683565275, %v80
    %v82 = vshll.u32 683565275, %v79
    %v83 = vshrl.u32 2475754826, %v80
    %v84 = vor.u32 %v82, %v83
    %v85 = vshll.u32 2475754826, %v79
    %v86 = vshrl.u32 2131351028, %v80
    %v87 = vor.u32 %v85, %v86
    %v88 = vshll.u32 2131351028, %v79
    %v89 = vshrl.u32 2102212464, %v80
    %v90 = vor.u32 %v88, %v89
    %v91 = vshll.u32 2102212464, %v79
    %v92 = vshrl.u32 920167782, %v80
    %v93 = vor.u32 %v91, %v92
    %v94 = vshll.u32 920167782, %v79
    %v95 = vshrl.u32 1326507024, %v80
    %v96 = vor.u32 %v94, %v95
    %vm97 = vcmp.lt.s32.totalorder %v78, 1
    %vm98 = vcmp.lt.s32.totalorder %v78, 2
    %vm99 = vcmp.lt.s32.totalorder %v78, 3
    %vm100 = vcmp.lt.s32.totalorder %v78, 4
    %v101 = vsel %vm97, %v81, %v84
    %v102 = vsel %vm100, %v90, 2102212464
    %v103 = vsel %vm99, %v87, %v102
    %v104 = vsel %vm98, %v101, %v103
    %v105 = vsel %vm97, %v84, %v87
    %v106 = vsel %vm100, %v93, 920167782
    %v107 = vsel %vm99, %v90, %v106
    %v108 = vsel %vm98, %v105, %v107
    %v109 = vsel %vm97, %v87, %v90
    %v110 = vsel %vm100, %v96, 1326507024
    %v111 = vsel %vm99, %v93, %v110
    %v112 = vsel %vm98, %v109, %v111
    %v113 = vshll.u32 %v73, 8
    %v114 = vmul.u32.u64.compose %v113, %v112
    %v115 = vextract.low.u32 %v114
    %v116 = vextract.high.u32 %v114
    %v117 = vmul.u32.u64.compose %v113, %v108
    %v118 = vextract.low.u32 %v117
    %v119 = vextract.high.u32 %v117
    %v120 = vmul.u32 %v113, %v104
    %v121 = vadd.s32 %v116, %v118
    %vm122 = vc.u32 %v116, %v118
    %v123 = vadd.s32 %v119, 1
    %v124 = vsel %vm122, %v123, %v119
    %v125 = vadd.s32 %v120, %v124
    %v126 = vadd.s32 %v125, 536870912
    %v127 = vshrl.u32 %v126, 30
    %v128 = vshll.u32 %v127, 30
    %v129 = vsub.s32 %v125, %v128
    %vm130 = vcmp.lt.s32.totalorder %v129, 0
    %v131 = vsub.s32 0, %v129
    %v132 = vsel %vm130, %v131, %v129
    %v133 = vclz %v132
    %v134 = vsub.s32 %v133, 2
    %vm135 = vcmp.gt.s32.totalorder 0, %v134
    %v136 = vsel %vm135, 0, %v134
    %v137 = vsub.s32 32, %v136
    %v138 = vshll.u32 %v129, %v136
    %v139 = vshrl.u32 %v121, %v137
    %v140 = vor.u32 %v138, %v139
    %v141 = vsub.s32 4294967266, %v136
    %v142 = vadd.s32 %v141, 127
    %v143 = vshll.u32 %v142, 23
    %v144 = vor.u32 4788187, %v143
    %v145 = vand.u32 2147483647, %v144
    %v147 = vcvt.s32.f32 %v140
    %v148 = vmul.f32 %v147, %v145
    %v149 = vxor.u32 %v148, 2147483648
    %v150 = vsel %vm67, %v149, %v148
    %v151 = vsub.s32 4, %v127
    %v152 = vsel %vm67, %v151, %v127
    %v153 = vsel %vm66, %v64, %v150
    %v154 = vsel %vm66, 0, %v152
    %v155 = vcosq.f32.pop %v153
    %v156 = vsinq.f32.pop %v153
    %vm157 = vweird.f32 %v64
    %v158 = vand.u32 %v154, 3
    %vm159 = vcmp.lt.s32.totalorder %v158, 2
    %vm160 = vcmp.eq.s32.totalorder %v158, 0
    %v161 = vxor.u32 %v156, 2147483648
    %v162 = vsel %vm160, %v155, %v161
    %vm163 = vcmp.eq.s32.totalorder %v158, 2
    %v164 = vxor.u32 %v155, 2147483648
    %v165 = vsel %vm163, %v164, %v156
    %v166 = vsel %vm159, %v162, %v165
    %v167 = vsel %vm157, nan, %v166
    %v168 = vand.u32 2147483647, %v64
    %vm169 = vcmp.le.f32.partialorder %v168, 0.7853982
    %vm170 = vcmp.lt.s32.totalorder %v64, 0
    %v171 = vand.u32 %v64, 2139095040
    %v172 = vshrl.u32 %v171, 23
    %v173 = vsub.s32 %v172, 127
    %v174 = vand.u32 2147483647, %v64
    %v175 = vand.u32 %v174, 8388607
    %v176 = vor.u32 %v175, 8388608
    %v177 = vsub.s32 0, %v176
    %v178 = vadd.s32 %v173, 1
    %vm179 = vcmp.gt.s32.totalorder %v178, 0
    %v180 = vsel %vm179, %v178, 0
    %v181 = vshrl.u32 %v180, 5
    %v182 = vand.u32 %v180, 31
    %v183 = vsub.s32 32, %v182
    %v184 = vshrl.u32 683565275, %v183
    %v185 = vshll.u32 683565275, %v182
    %v186 = vshrl.u32 2475754826, %v183
    %v187 = vor.u32 %v185, %v186
    %v188 = vshll.u32 2475754826, %v182
    %v189 = vshrl.u32 2131351028, %v183
    %v190 = vor.u32 %v188, %v189
    %v191 = vshll.u32 2131351028, %v182
    %v192 = vshrl.u32 2102212464, %v183
    %v193 = vor.u32 %v191, %v192
    %v194 = vshll.u32 2102212464, %v182
    %v195 = vshrl.u32 920167782, %v183
    %v196 = vor.u32 %v194, %v195
    %v197 = vshll.u32 920167782, %v182
    %v198 = vshrl.u32 1326507024, %v183
    %v199 = vor.u32 %v197, %v198
    %vm200 = vcmp.lt.s32.totalorder %v181, 1
    %vm201 = vcmp.lt.s32.totalorder %v181, 2
    %vm202 = vcmp.lt.s32.totalorder %v181, 3
    %vm203 = vcmp.lt.s32.totalorder %v181, 4
    %v204 = vsel %vm200, %v184, %v187
    %v205 = vsel %vm203, %v193, 2102212464
    %v206 = vsel %vm202, %v190, %v205
    %v207 = vsel %vm201, %v204, %v206
    %v208 = vsel %vm200, %v187, %v190
    %v209 = vsel %vm203, %v196, 920167782
    %v210 = vsel %vm202, %v193, %v209
    %v211 = vsel %vm201, %v208, %v210
    %v212 = vsel %vm200, %v190, %v193
    %v213 = vsel %vm203, %v199, 1326507024
    %v214 = vsel %vm202, %v196, %v213
    %v215 = vsel %vm201, %v212, %v214
    %v216 = vshll.u32 %v176, 8
    %v217 = vmul.u32.u64.compose %v216, %v215
    %v218 = vextract.low.u32 %v217
    %v219 = vextract.high.u32 %v217
    %v220 = vmul.u32.u64.compose %v216, %v211
    %v221 = vextract.low.u32 %v220
    %v222 = vextract.high.u32 %v220
    %v223 = vmul.u32 %v216, %v207
    %v224 = vadd.s32 %v219, %v221
    %vm225 = vc.u32 %v219, %v221
    %v226 = vadd.s32 %v222, 1
    %v227 = vsel %vm225, %v226, %v222
    %v228 = vadd.s32 %v223, %v227
    %v229 = vadd.s32 %v228, 536870912
    %v230 = vshrl.u32 %v229, 30
    %v231 = vshll.u32 %v230, 30
    %v232 = vsub.s32 %v228, %v231
    %vm233 = vcmp.lt.s32.totalorder %v232, 0
    %v234 = vsub.s32 0, %v232
    %v235 = vsel %vm233, %v234, %v232
    %v236 = vclz %v235
    %v237 = vsub.s32 %v236, 2
    %vm238 = vcmp.gt.s32.totalorder 0, %v237
    %v239 = vsel %vm238, 0, %v237
    %v240 = vsub.s32 32, %v239
    %v241 = vshll.u32 %v232, %v239
    %v242 = vshrl.u32 %v224, %v240
    %v243 = vor.u32 %v241, %v242
    %v244 = vsub.s32 4294967266, %v239
    %v245 = vadd.s32 %v244, 127
    %v246 = vshll.u32 %v245, 23
    %v247 = vor.u32 4788187, %v246
    %v248 = vand.u32 2147483647, %v247
    %v250 = vcvt.s32.f32 %v243
    %v251 = vmul.f32 %v250, %v248
    %v252 = vxor.u32 %v251, 2147483648
    %v253 = vsel %vm170, %v252, %v251
    %v254 = vsub.s32 4, %v230
    %v255 = vsel %vm170, %v254, %v230
    %v256 = vsel %vm169, %v64, %v253
    %v257 = vsel %vm169, 0, %v255
    %v258 = vcosq.f32.pop %v256
    %v259 = vsinq.f32.pop %v256
    %vm260 = vweird.f32 %v64
    %v261 = vadd.s32 %v257, 3
    %v262 = vand.u32 %v261, 3
    %vm263 = vcmp.lt.s32.totalorder %v262, 2
    %vm264 = vcmp.eq.s32.totalorder %v262, 0
    %v265 = vxor.u32 %v259, 2147483648
    %v266 = vsel %vm264, %v258, %v265
    %vm267 = vcmp.eq.s32.totalorder %v262, 2
    %v268 = vxor.u32 %v258, 2147483648
    %v269 = vsel %vm267, %v268, %v259
    %v270 = vsel %vm263, %v266, %v269
    %v271 = vsel %vm260, nan, %v270
    %v272 = vld [vmem:[#allocation2] sm:$0xff]
    %v273 = vld [vmem:[#allocation2 + $0x8] sm:$0xf]
    %v274 = vld [vmem:[#allocation2 + $0xc] sm:$0xff]
    %v275 = vld [vmem:[#allocation2 + $0x14] sm:$0xf]
    %v276 = vld [vmem:[#allocation2 + $0x18] sm:$0xff]
    %v277 = vld [vmem:[#allocation2 + $0x20] sm:$0xf]
    %v278 = vld [vmem:[#allocation2 + $0x24] sm:$0xff]
    %v279 = vld [vmem:[#allocation2 + $0x2c] sm:$0xf]
    %v280 = vld [vmem:[#allocation2 + $0x30] sm:$0xff]
    %v281 = vld [vmem:[#allocation2 + $0x38] sm:$0xf]
    %v282 = vld [vmem:[#allocation2 + $0x3c] sm:$0xff]
    %v283 = vld [vmem:[#allocation2 + $0x44] sm:$0xf]
    %v284 = vld [vmem:[#allocation2 + $0x48] sm:$0xff]
    %v285 = vld [vmem:[#allocation2 + $0x50] sm:$0xf]
    %v286 = vld [vmem:[#allocation2 + $0x54] sm:$0xff]
    %v287 = vld [vmem:[#allocation2 + $0x5c] sm:$0xf]
    %v288 = vld [vmem:[#allocation2 + $0x60] sm:$0xff]
    %v289 = vld [vmem:[#allocation2 + $0x68] sm:$0xf]
    %v290 = vld [vmem:[#allocation2 + $0x6c] sm:$0xff]
    %v291 = vld [vmem:[#allocation2 + $0x74] sm:$0xf]
    %v292 = vld [vmem:[#allocation2 + $0x78] sm:$0xff]
    %v293 = vld [vmem:[#allocation2 + $0x80] sm:$0xf]
    %v294 = vld [vmem:[#allocation2 + $0x84] sm:$0xff]
    %v295 = vld [vmem:[#allocation2 + $0x8c] sm:$0xf]
    %v296 = vld [vmem:[#allocation2 + $0x90] sm:$0xff]
    %v297 = vld [vmem:[#allocation2 + $0x98] sm:$0xf]
    %v298 = vld [vmem:[#allocation2 + $0x9c] sm:$0xff]
    %v299 = vld [vmem:[#allocation2 + $0xa4] sm:$0xf]
    %v300 = vld [vmem:[#allocation2 + $0xa8] sm:$0xff]
    %v301 = vld [vmem:[#allocation2 + $0xb0] sm:$0xf]
    %v302 = vld [vmem:[#allocation2 + $0xb4] sm:$0xff]
    %v303 = vld [vmem:[#allocation2 + $0xbc] sm:$0xf]
    %v304 = vld [vmem:[#allocation2 + $0xc0] sm:$0xff]
    %v305 = vld [vmem:[#allocation2 + $0xc8] sm:$0xf]
    %v306 = vld [vmem:[#allocation2 + $0xcc] sm:$0xff]
    %v307 = vld [vmem:[#allocation2 + $0xd4] sm:$0xf]
    %v308 = vld [vmem:[#allocation2 + $0xd8] sm:$0xff]
    %v309 = vld [vmem:[#allocation2 + $0xe0] sm:$0xf]
    %v310 = vld [vmem:[#allocation2 + $0xe4] sm:$0xff]
    %v311 = vld [vmem:[#allocation2 + $0xec] sm:$0xf]
    %v312 = vld [vmem:[#allocation2 + $0xf0] sm:$0xff]
    %v313 = vld [vmem:[#allocation2 + $0xf8] sm:$0xf]
    %v314 = vld [vmem:[#allocation2 + $0xfc] sm:$0xff]
    %v315 = vld [vmem:[#allocation2 + $0x104] sm:$0xf]
    %v316 = vld [vmem:[#allocation2 + $0x108] sm:$0xff]
    %v317 = vld [vmem:[#allocation2 + $0x110] sm:$0xf]
    %v318 = vld [vmem:[#allocation2 + $0x114] sm:$0xff]
    %v319 = vld [vmem:[#allocation2 + $0x11c] sm:$0xf]
    %v320 = vld [vmem:[#allocation2 + $0x120] sm:$0xff]
    %v321 = vld [vmem:[#allocation2 + $0x128] sm:$0xf]
    %v322 = vld [vmem:[#allocation2 + $0x12c] sm:$0xff]
    %v323 = vld [vmem:[#allocation2 + $0x134] sm:$0xf]
    %v324 = vld [vmem:[#allocation2 + $0x138] sm:$0xff]
    %v325 = vld [vmem:[#allocation2 + $0x140] sm:$0xf]
    %v326 = vld [vmem:[#allocation2 + $0x144] sm:$0xff]
    %v327 = vld [vmem:[#allocation2 + $0x14c] sm:$0xf]
    %v328 = vld [vmem:[#allocation2 + $0x150] sm:$0xff]
    %v329 = vld [vmem:[#allocation2 + $0x158] sm:$0xf]
    %v330 = vld [vmem:[#allocation2 + $0x15c] sm:$0xff]
    %v331 = vld [vmem:[#allocation2 + $0x164] sm:$0xf]
    %v332 = vld [vmem:[#allocation2 + $0x168] sm:$0xff]
    %v333 = vld [vmem:[#allocation2 + $0x170] sm:$0xf]
    %v334 = vld [vmem:[#allocation2 + $0x174] sm:$0xff]
    %v335 = vld [vmem:[#allocation2 + $0x17c] sm:$0xf]
    %v336 = vunpack.c.l.bf16 %v272
    %v337 = vunpack.c.h.bf16 %v272
    %v338 = vunpack.c.l.bf16 %v273
    %v339 = vunpack.c.l.bf16 %v274
    %v340 = vunpack.c.h.bf16 %v274
    %v341 = vunpack.c.l.bf16 %v275
    %v342 = vunpack.c.l.bf16 %v276
    %v343 = vunpack.c.h.bf16 %v276
    %v344 = vunpack.c.l.bf16 %v277
    %v345 = vunpack.c.l.bf16 %v278
    %v346 = vunpack.c.h.bf16 %v278
    %v347 = vunpack.c.l.bf16 %v279
    %v348 = vunpack.c.l.bf16 %v280
    %v349 = vunpack.c.h.bf16 %v280
    %v350 = vunpack.c.l.bf16 %v281
    %v351 = vunpack.c.l.bf16 %v282
    %v352 = vunpack.c.h.bf16 %v282
    %v353 = vunpack.c.l.bf16 %v283
    %v354 = vunpack.c.l.bf16 %v284
    %v355 = vunpack.c.h.bf16 %v284
    %v356 = vunpack.c.l.bf16 %v285
    %v357 = vunpack.c.l.bf16 %v286
    %v358 = vunpack.c.h.bf16 %v286
    %v359 = vunpack.c.l.bf16 %v287
    %v360 = vunpack.c.l.bf16 %v288
    %v361 = vunpack.c.h.bf16 %v288
    %v362 = vunpack.c.l.bf16 %v289
    %v363 = vunpack.c.l.bf16 %v290
    %v364 = vunpack.c.h.bf16 %v290
    %v365 = vunpack.c.l.bf16 %v291
    %v366 = vunpack.c.l.bf16 %v292
    %v367 = vunpack.c.h.bf16 %v292
    %v368 = vunpack.c.l.bf16 %v293
    %v369 = vunpack.c.l.bf16 %v294
    %v370 = vunpack.c.h.bf16 %v294
    %v371 = vunpack.c.l.bf16 %v295
    %v372 = vunpack.c.l.bf16 %v296
    %v373 = vunpack.c.h.bf16 %v296
    %v374 = vunpack.c.l.bf16 %v297
    %v375 = vunpack.c.l.bf16 %v298
    %v376 = vunpack.c.h.bf16 %v298
    %v377 = vunpack.c.l.bf16 %v299
    %v378 = vunpack.c.l.bf16 %v300
    %v379 = vunpack.c.h.bf16 %v300
    %v380 = vunpack.c.l.bf16 %v301
    %v381 = vunpack.c.l.bf16 %v302
    %v382 = vunpack.c.h.bf16 %v302
    %v383 = vunpack.c.l.bf16 %v303
    %v384 = vunpack.c.l.bf16 %v304
    %v385 = vunpack.c.h.bf16 %v304
    %v386 = vunpack.c.l.bf16 %v305
    %v387 = vunpack.c.l.bf16 %v306
    %v388 = vunpack.c.h.bf16 %v306
    %v389 = vunpack.c.l.bf16 %v307
    %v390 = vunpack.c.l.bf16 %v308
    %v391 = vunpack.c.h.bf16 %v308
    %v392 = vunpack.c.l.bf16 %v309
    %v393 = vunpack.c.l.bf16 %v310
    %v394 = vunpack.c.h.bf16 %v310
    %v395 = vunpack.c.l.bf16 %v311
    %v396 = vunpack.c.l.bf16 %v312
    %v397 = vunpack.c.h.bf16 %v312
    %v398 = vunpack.c.l.bf16 %v313
    %v399 = vunpack.c.l.bf16 %v314
    %v400 = vunpack.c.h.bf16 %v314
    %v401 = vunpack.c.l.bf16 %v315
    %v402 = vunpack.c.l.bf16 %v316
    %v403 = vunpack.c.h.bf16 %v316
    %v404 = vunpack.c.l.bf16 %v317
    %v405 = vunpack.c.l.bf16 %v318
    %v406 = vunpack.c.h.bf16 %v318
    %v407 = vunpack.c.l.bf16 %v319
    %v408 = vunpack.c.l.bf16 %v320
    %v409 = vunpack.c.h.bf16 %v320
    %v410 = vunpack.c.l.bf16 %v321
    %v411 = vunpack.c.l.bf16 %v322
    %v412 = vunpack.c.h.bf16 %v322
    %v413 = vunpack.c.l.bf16 %v323
    %v414 = vunpack.c.l.bf16 %v324
    %v415 = vunpack.c.h.bf16 %v324
    %v416 = vunpack.c.l.bf16 %v325
    %v417 = vunpack.c.l.bf16 %v326
    %v418 = vunpack.c.h.bf16 %v326
    %v419 = vunpack.c.l.bf16 %v327
    %v420 = vunpack.c.l.bf16 %v328
    %v421 = vunpack.c.h.bf16 %v328
    %v422 = vunpack.c.l.bf16 %v329
    %v423 = vunpack.c.l.bf16 %v330
    %v424 = vunpack.c.h.bf16 %v330
    %v425 = vunpack.c.l.bf16 %v331
    %v426 = vunpack.c.l.bf16 %v332
    %v427 = vunpack.c.h.bf16 %v332
    %v428 = vunpack.c.l.bf16 %v333
    %v429 = vunpack.c.l.bf16 %v334
    %v430 = vunpack.c.h.bf16 %v334
    %v431 = vunpack.c.l.bf16 %v335
    %432 = vmatprep.subr.mxu0 %v337
    %433 = vmatpush1.msra.mxu0 %v336
    %434 = vmatprep.subr.mxu0 %v340
    %435 = vmatpush1.msra.mxu0 %v339
    %436 = vmatprep.subr.mxu0 %v343
    %437 = vmatpush1.msra.mxu0 %v342
    %438 = vmatprep.subr.mxu0 %v346
    %439 = vmatpush1.msra.mxu0 %v345
    %440 = vmatprep.subr.mxu0 %v349
    %441 = vmatpush1.msra.mxu0 %v348
    %442 = vmatprep.subr.mxu0 %v352
    %443 = vmatpush1.msra.mxu0 %v351
    %444 = vmatprep.subr.mxu0 %v355
    %445 = vmatpush1.msra.mxu0 %v354
    %446 = vmatprep.subr.mxu0 %v358
    %447 = vmatpush1.msra.mxu0 %v357
    %448 = vmatprep.subr.mxu0 %v361
    %449 = vmatpush1.msra.mxu0 %v360
    %450 = vmatprep.subr.mxu0 %v364
    %451 = vmatpush1.msra.mxu0 %v363
    %452 = vmatprep.subr.mxu0 %v367
    %453 = vmatpush1.msra.mxu0 %v366
    %454 = vmatprep.subr.mxu0 %v370
    %455 = vmatpush1.msra.mxu0 %v369
    %456 = vmatprep.subr.mxu0 %v373
    %457 = vmatpush1.msra.mxu0 %v372
    %458 = vmatprep.subr.mxu0 %v376
    %459 = vmatpush1.msra.mxu0 %v375
    %460 = vmatprep.subr.mxu0 %v379
    %461 = vmatpush1.msra.mxu0 %v378
    %462 = vmatprep.subr.mxu0 %v382
    %463 = vmatpush1.msra.mxu0 %v381
    %464 = vmatprep.subr.mxu0 %v385
    %465 = vmatpush1.msra.mxu0 %v384
    %466 = vmatprep.subr.mxu0 %v388
    %467 = vmatpush1.msra.mxu0 %v387
    %468 = vmatprep.subr.mxu0 %v391
    %469 = vmatpush1.msra.mxu0 %v390
    %470 = vmatprep.subr.mxu0 %v394
    %471 = vmatpush1.msra.mxu0 %v393
    %472 = vmatprep.subr.mxu0 %v397
    %473 = vmatpush1.msra.mxu0 %v396
    %474 = vmatprep.subr.mxu0 %v400
    %475 = vmatpush1.msra.mxu0 %v399
    %476 = vmatprep.subr.mxu0 %v403
    %477 = vmatpush1.msra.mxu0 %v402
    %478 = vmatprep.subr.mxu0 %v406
    %479 = vmatpush1.msra.mxu0 %v405
    %480 = vmatprep.subr.mxu0 %v409
    %481 = vmatpush1.msra.mxu0 %v408
    %482 = vmatprep.subr.mxu0 %v412
    %483 = vmatpush1.msra.mxu0 %v411
    %484 = vmatprep.subr.mxu0 %v415
    %485 = vmatpush1.msra.mxu0 %v414
    %486 = vmatprep.subr.mxu0 %v418
    %487 = vmatpush1.msra.mxu0 %v417
    %488 = vmatprep.subr.mxu0 %v421
    %489 = vmatpush1.msra.mxu0 %v420
    %490 = vmatprep.subr.mxu0 %v424
    %491 = vmatpush1.msra.mxu0 %v423
    %492 = vmatprep.subr.mxu0 %v427
    %493 = vmatpush1.msra.mxu0 %v426
    %494 = vmatprep.subr.mxu0 %v430
    %495 = vmatpush1.msra.mxu0 %v429
    %496 = vmatprep.mubr.f32.mxu0 %v271
    %497 = vmatmul.mubr.f32.gmra.mrb[0].mxu0 %v167
    %v498 = vpop.f32.mrb[0].mxu0
    %v499 = vadd.f32 0.0, %v498
    %v500 = vpop.f32.mrb[0].mxu0
    %v501 = vadd.f32 0.0, %v500
    %502 = vdwg.mxu0
    %503 = vmatprep.subr.mxu0 0.0
    %504 = vmatpush1.msra.mxu0 %v338
    %505 = vmatprep.subr.mxu0 0.0
    %506 = vmatpush1.msra.mxu0 %v341
    %507 = vmatprep.subr.mxu0 0.0
    %508 = vmatpush1.msra.mxu0 %v344
    %509 = vmatprep.subr.mxu0 0.0
    %510 = vmatpush1.msra.mxu0 %v347
    %511 = vmatprep.subr.mxu0 0.0
    %512 = vmatpush1.msra.mxu0 %v350
    %513 = vmatprep.subr.mxu0 0.0
    %514 = vmatpush1.msra.mxu0 %v353
    %515 = vmatprep.subr.mxu0 0.0
    %516 = vmatpush1.msra.mxu0 %v356
    %517 = vmatprep.subr.mxu0 0.0
    %518 = vmatpush1.msra.mxu0 %v359
    %519 = vmatprep.subr.mxu0 0.0
    %520 = vmatpush1.msra.mxu0 %v362
    %521 = vmatprep.subr.mxu0 0.0
    %522 = vmatpush1.msra.mxu0 %v365
    %523 = vmatprep.subr.mxu0 0.0
    %524 = vmatpush1.msra.mxu0 %v368
    %525 = vmatprep.subr.mxu0 0.0
    %526 = vmatpush1.msra.mxu0 %v371
    %527 = vmatprep.subr.mxu0 0.0
    %528 = vmatpush1.msra.mxu0 %v374
    %529 = vmatprep.subr.mxu0 0.0
    %530 = vmatpush1.msra.mxu0 %v377
    %531 = vmatprep.subr.mxu0 0.0
    %532 = vmatpush1.msra.mxu0 %v380
    %533 = vmatprep.subr.mxu0 0.0
    %534 = vmatpush1.msra.mxu0 %v383
    %535 = vmatprep.subr.mxu0 0.0
    %536 = vmatpush1.msra.mxu0 %v386
    %537 = vmatprep.subr.mxu0 0.0
    %538 = vmatpush1.msra.mxu0 %v389
    %539 = vmatprep.subr.mxu0 0.0
    %540 = vmatpush1.msra.mxu0 %v392
    %541 = vmatprep.subr.mxu0 0.0
    %542 = vmatpush1.msra.mxu0 %v395
    %543 = vmatprep.subr.mxu0 0.0
    %544 = vmatpush1.msra.mxu0 %v398
    %545 = vmatprep.subr.mxu0 0.0
    %546 = vmatpush1.msra.mxu0 %v401
    %547 = vmatprep.subr.mxu0 0.0
    %548 = vmatpush1.msra.mxu0 %v404
    %549 = vmatprep.subr.mxu0 0.0
    %550 = vmatpush1.msra.mxu0 %v407
    %551 = vmatprep.subr.mxu0 0.0
    %552 = vmatpush1.msra.mxu0 %v410
    %553 = vmatprep.subr.mxu0 0.0
    %554 = vmatpush1.msra.mxu0 %v413
    %555 = vmatprep.subr.mxu0 0.0
    %556 = vmatpush1.msra.mxu0 %v416
    %557 = vmatprep.subr.mxu0 0.0
    %558 = vmatpush1.msra.mxu0 %v419
    %559 = vmatprep.subr.mxu0 0.0
    %560 = vmatpush1.msra.mxu0 %v422
    %561 = vmatprep.subr.mxu0 0.0
    %562 = vmatpush1.msra.mxu0 %v425
    %563 = vmatprep.subr.mxu0 0.0
    %564 = vmatpush1.msra.mxu0 %v428
    %565 = vmatprep.subr.mxu0 0.0
    %566 = vmatpush1.msra.mxu0 %v431
    %567 = vmatprep.mubr.f32.mxu0 %v271
    %568 = vmatmul.mubr.f32.gmra.mrb[0].mxu0 %v167
    %v569 = vpop.f32.mrb[0].mxu0
    %v570 = vadd.f32 0.0, %v569
    %v571 = vpop.f32.mrb[0].mxu0
    %572 = vdwg.mxu0
    %v573 = vld [vmem:[%s5] sm:$0xff]
    %v574 = vlaneseq
    %v575 = vshrl.u32 %v574, 7
    %v576 = vsub.s32 0, %v575
    %v577 = vrot.slane %v573, %v576
    %v578 = vadd.f32 %v499, %v577
    %v579 = vmul.f32 %v578, 0.5
    %v580 = vtanh.pop %v579
    %v581 = vmul.f32 %v580, 0.5
    %v582 = vadd.f32 %v581, 0.5
    %v583 = vmul.f32 %v578, %v582
    %v584 = vld [vmem:[#allocation4] sm:$0xf]
    %v585 = vld [vmem:[#allocation4 + $0x4] sm:$0xf]
    %v586 = vld [vmem:[#allocation4 + $0x8] sm:$0xf]
    %v587 = vld [vmem:[#allocation4 + $0xc] sm:$0xf]
    %v588 = vld [vmem:[#allocation4 + $0x10] sm:$0xf]
    %v589 = vld [vmem:[#allocation4 + $0x14] sm:$0xf]
    %v590 = vld [vmem:[#allocation4 + $0x18] sm:$0xf]
    %v591 = vld [vmem:[#allocation4 + $0x1c] sm:$0xf]
    %v592 = vld [vmem:[#allocation4 + $0x20] sm:$0xf]
    %v593 = vld [vmem:[#allocation4 + $0x24] sm:$0xf]
    %v594 = vld [vmem:[#allocation4 + $0x28] sm:$0xf]
    %v595 = vld [vmem:[#allocation4 + $0x2c] sm:$0xf]
    %v596 = vld [vmem:[#allocation4 + $0x30] sm:$0xf]
    %v597 = vld [vmem:[#allocation4 + $0x34] sm:$0xf]
    %v598 = vld [vmem:[#allocation4 + $0x38] sm:$0xf]
    %v599 = vld [vmem:[#allocation4 + $0x3c] sm:$0xf]
    %v600 = vunpack.c.l.bf16 %v584
    %v601 = vunpack.c.l.bf16 %v585
    %v602 = vunpack.c.l.bf16 %v586
    %v603 = vunpack.c.l.bf16 %v587
    %v604 = vunpack.c.l.bf16 %v588
    %v605 = vunpack.c.l.bf16 %v589
    %v606 = vunpack.c.l.bf16 %v590
    %v607 = vunpack.c.l.bf16 %v591
    %v608 = vunpack.c.l.bf16 %v592
    %v609 = vunpack.c.l.bf16 %v593
    %v610 = vunpack.c.l.bf16 %v594
    %v611 = vunpack.c.l.bf16 %v595
    %v612 = vunpack.c.l.bf16 %v596
    %v613 = vunpack.c.l.bf16 %v597
    %v614 = vunpack.c.l.bf16 %v598
    %v615 = vunpack.c.l.bf16 %v599
    %v616 = vlaneseq
    %v617 = vshrl.u32 %v616, 7
    %v618 = vsub.s32 1, %v617
    %v619 = vrot.slane %v573, %v618
    %620 = vmatprep.subr.mxu0 0.0
    %621 = vmatpush1.msra.mxu0 %v600
    %622 = vmatprep.subr.mxu0 0.0
    %623 = vmatpush1.msra.mxu0 %v601
    %624 = vmatprep.subr.mxu0 0.0
    %625 = vmatpush1.msra.mxu0 %v602
    %626 = vmatprep.subr.mxu0 0.0
    %627 = vmatpush1.msra.mxu0 %v603
    %628 = vmatprep.subr.mxu0 0.0
    %629 = vmatpush1.msra.mxu0 %v604
    %630 = vmatprep.subr.mxu0 0.0
    %631 = vmatpush1.msra.mxu0 %v605
    %632 = vmatprep.subr.mxu0 0.0
    %633 = vmatpush1.msra.mxu0 %v606
    %634 = vmatprep.subr.mxu0 0.0
    %635 = vmatpush1.msra.mxu0 %v607
    %636 = vmatprep.subr.mxu0 0.0
    %637 = vmatpush1.msra.mxu0 %v608
    %638 = vmatprep.subr.mxu0 0.0
    %639 = vmatpush1.msra.mxu0 %v609
    %640 = vmatprep.subr.mxu0 0.0
    %641 = vmatpush1.msra.mxu0 %v610
    %642 = vmatprep.subr.mxu0 0.0
    %643 = vmatpush1.msra.mxu0 %v611
    %644 = vmatprep.subr.mxu0 0.0
    %645 = vmatpush1.msra.mxu0 %v612
    %646 = vmatprep.subr.mxu0 0.0
    %647 = vmatpush1.msra.mxu0 %v613
    %648 = vmatprep.subr.mxu0 0.0
    %649 = vmatpush1.msra.mxu0 %v614
    %650 = vmatprep.subr.mxu0 0.0
    %651 = vmatpush1.msra.mxu0 %v615
    %652 = vmatprep.subr.mxu0 0.0
    %653 = vmatpush1.msra.mxu0 0.0
    %654 = vmatprep.subr.mxu0 0.0
    %655 = vmatpush1.msra.mxu0 0.0
    %656 = vmatprep.subr.mxu0 0.0
    %657 = vmatpush1.msra.mxu0 0.0
    %658 = vmatprep.subr.mxu0 0.0
    %659 = vmatpush1.msra.mxu0 0.0
    %660 = vmatprep.subr.mxu0 0.0
    %661 = vmatpush1.msra.mxu0 0.0
    %662 = vmatprep.subr.mxu0 0.0
    %663 = vmatpush1.msra.mxu0 0.0
    %664 = vmatprep.subr.mxu0 0.0
    %665 = vmatpush1.msra.mxu0 0.0
    %666 = vmatprep.subr.mxu0 0.0
    %667 = vmatpush1.msra.mxu0 0.0
    %668 = vmatprep.subr.mxu0 0.0
    %669 = vmatpush1.msra.mxu0 0.0
    %670 = vmatprep.subr.mxu0 0.0
    %671 = vmatpush1.msra.mxu0 0.0
    %672 = vmatprep.subr.mxu0 0.0
    %673 = vmatpush1.msra.mxu0 0.0
    %674 = vmatprep.subr.mxu0 0.0
    %675 = vmatpush1.msra.mxu0 0.0
    %676 = vmatprep.subr.mxu0 0.0
    %677 = vmatpush1.msra.mxu0 0.0
    %678 = vmatprep.subr.mxu0 0.0
    %679 = vmatpush1.msra.mxu0 0.0
    %680 = vmatprep.subr.mxu0 0.0
    %681 = vmatpush1.msra.mxu0 0.0
    %682 = vmatprep.subr.mxu0 0.0
    %683 = vmatpush1.msra.mxu0 0.0
    %684 = vmatprep.mubr.f32.mxu0 0.0
    %685 = vmatmul.mubr.f32.gmra.mrb[0].mxu0 %v583
    %v686 = vpop.f32.mrb[0].mxu0
    %v687 = vadd.f32 %v619, %v686
    %v688 = vpop.f32.mrb[0].mxu0
    %689 = vdwg.mxu0
    %s690 = scalar_lea.vmem %s5, 8
    %v691 = vld [vmem:[%s690] sm:$0xff]
    %v692 = vlaneseq
    %v693 = vshrl.u32 %v692, 7
    %v694 = vsub.s32 0, %v693
    %v695 = vrot.slane %v691, %v694
    %v696 = vadd.f32 %v501, %v695
    %v697 = vmul.f32 %v696, 0.5
    %v698 = vtanh.pop %v697
    %v699 = vmul.f32 %v698, 0.5
    %v700 = vadd.f32 %v699, 0.5
    %v701 = vmul.f32 %v696, %v700
    %s702 = scalar_lea.vmem [#allocation4], 192
    %v703 = vld [vmem:[%s702] sm:$0xf]
    %v704 = vld [vmem:[%s702 + $0x4] sm:$0xf]
    %v705 = vld [vmem:[%s702 + $0x8] sm:$0xf]
    %v706 = vld [vmem:[%s702 + $0xc] sm:$0xf]
    %v707 = vld [vmem:[%s702 + $0x10] sm:$0xf]
    %v708 = vld [vmem:[%s702 + $0x14] sm:$0xf]
    %v709 = vld [vmem:[%s702 + $0x18] sm:$0xf]
    %v710 = vld [vmem:[%s702 + $0x1c] sm:$0xf]
    %v711 = vld [vmem:[%s702 + $0x20] sm:$0xf]
    %v712 = vld [vmem:[%s702 + $0x24] sm:$0xf]
    %v713 = vld [vmem:[%s702 + $0x28] sm:$0xf]
    %v714 = vld [vmem:[%s702 + $0x2c] sm:$0xf]
    %v715 = vld [vmem:[%s702 + $0x30] sm:$0xf]
    %v716 = vld [vmem:[%s702 + $0x34] sm:$0xf]
    %v717 = vld [vmem:[%s702 + $0x38] sm:$0xf]
    %v718 = vld [vmem:[%s702 + $0x3c] sm:$0xf]
    %v719 = vunpack.c.l.bf16 %v703
    %v720 = vunpack.c.l.bf16 %v704
    %v721 = vunpack.c.l.bf16 %v705
    %v722 = vunpack.c.l.bf16 %v706
    %v723 = vunpack.c.l.bf16 %v707
    %v724 = vunpack.c.l.bf16 %v708
    %v725 = vunpack.c.l.bf16 %v709
    %v726 = vunpack.c.l.bf16 %v710
    %v727 = vunpack.c.l.bf16 %v711
    %v728 = vunpack.c.l.bf16 %v712
    %v729 = vunpack.c.l.bf16 %v713
    %v730 = vunpack.c.l.bf16 %v714
    %v731 = vunpack.c.l.bf16 %v715
    %v732 = vunpack.c.l.bf16 %v716
    %v733 = vunpack.c.l.bf16 %v717
    %v734 = vunpack.c.l.bf16 %v718
    %v735 = vlaneseq
    %v736 = vshrl.u32 %v735, 7
    %v737 = vsub.s32 1, %v736
    %v738 = vrot.slane %v691, %v737
    %739 = vmatprep.subr.mxu0 0.0
    %740 = vmatpush1.msra.mxu0 %v719
    %741 = vmatprep.subr.mxu0 0.0
    %742 = vmatpush1.msra.mxu0 %v720
    %743 = vmatprep.subr.mxu0 0.0
    %744 = vmatpush1.msra.mxu0 %v721
    %745 = vmatprep.subr.mxu0 0.0
    %746 = vmatpush1.msra.mxu0 %v722
    %747 = vmatprep.subr.mxu0 0.0
    %748 = vmatpush1.msra.mxu0 %v723
    %749 = vmatprep.subr.mxu0 0.0
    %750 = vmatpush1.msra.mxu0 %v724
    %751 = vmatprep.subr.mxu0 0.0
    %752 = vmatpush1.msra.mxu0 %v725
    %753 = vmatprep.subr.mxu0 0.0
    %754 = vmatpush1.msra.mxu0 %v726
    %755 = vmatprep.subr.mxu0 0.0
    %756 = vmatpush1.msra.mxu0 %v727
    %757 = vmatprep.subr.mxu0 0.0
    %758 = vmatpush1.msra.mxu0 %v728
    %759 = vmatprep.subr.mxu0 0.0
    %760 = vmatpush1.msra.mxu0 %v729
    %761 = vmatprep.subr.mxu0 0.0
    %762 = vmatpush1.msra.mxu0 %v730
    %763 = vmatprep.subr.mxu0 0.0
    %764 = vmatpush1.msra.mxu0 %v731
    %765 = vmatprep.subr.mxu0 0.0
    %766 = vmatpush1.msra.mxu0 %v732
    %767 = vmatprep.subr.mxu0 0.0
    %768 = vmatpush1.msra.mxu0 %v733
    %769 = vmatprep.subr.mxu0 0.0
    %770 = vmatpush1.msra.mxu0 %v734
    %771 = vmatprep.subr.mxu0 0.0
    %772 = vmatpush1.msra.mxu0 0.0
    %773 = vmatprep.subr.mxu0 0.0
    %774 = vmatpush1.msra.mxu0 0.0
    %775 = vmatprep.subr.mxu0 0.0
    %776 = vmatpush1.msra.mxu0 0.0
    %777 = vmatprep.subr.mxu0 0.0
    %778 = vmatpush1.msra.mxu0 0.0
    %779 = vmatprep.subr.mxu0 0.0
    %780 = vmatpush1.msra.mxu0 0.0
    %781 = vmatprep.subr.mxu0 0.0
    %782 = vmatpush1.msra.mxu0 0.0
    %783 = vmatprep.subr.mxu0 0.0
    %784 = vmatpush1.msra.mxu0 0.0
    %785 = vmatprep.subr.mxu0 0.0
    %786 = vmatpush1.msra.mxu0 0.0
    %787 = vmatprep.subr.mxu0 0.0
    %788 = vmatpush1.msra.mxu0 0.0
    %789 = vmatprep.subr.mxu0 0.0
    %790 = vmatpush1.msra.mxu0 0.0
    %791 = vmatprep.subr.mxu0 0.0
    %792 = vmatpush1.msra.mxu0 0.0
    %793 = vmatprep.subr.mxu0 0.0
    %794 = vmatpush1.msra.mxu0 0.0
    %795 = vmatprep.subr.mxu0 0.0
    %796 = vmatpush1.msra.mxu0 0.0
    %797 = vmatprep.subr.mxu0 0.0
    %798 = vmatpush1.msra.mxu0 0.0
    %799 = vmatprep.subr.mxu0 0.0
    %800 = vmatpush1.msra.mxu0 0.0
    %801 = vmatprep.subr.mxu0 0.0
    %802 = vmatpush1.msra.mxu0 0.0
    %803 = vmatprep.mubr.f32.mxu0 0.0
    %804 = vmatmul.mubr.f32.gmra.mrb[0].mxu0 %v701
    %v805 = vpop.f32.mrb[0].mxu0
    %v806 = vadd.f32 %v738, %v805
    %v807 = vpop.f32.mrb[0].mxu0
    %808 = vdwg.mxu0
    %s809 = scalar_lea.vmem %s5, 16
    %v810 = vld [vmem:[%s809] sm:$0xff]
    %v811 = vlaneseq
    %v812 = vshrl.u32 %v811, 7
    %v813 = vsub.s32 0, %v812
    %v814 = vrot.slane %v810, %v813
    %v815 = vadd.f32 %v570, %v814
    %v816 = vmul.f32 %v815, 0.5
    %v817 = vtanh.pop %v816
    %v818 = vmul.f32 %v817, 0.5
    %v819 = vadd.f32 %v818, 0.5
    %v820 = vmul.f32 %v815, %v819
    %s821 = scalar_lea.vmem [#allocation4], 384
    %v822 = vld [vmem:[%s821] sm:$0xf]
    %v823 = vld [vmem:[%s821 + $0x4] sm:$0xf]
    %v824 = vld [vmem:[%s821 + $0x8] sm:$0xf]
    %v825 = vld [vmem:[%s821 + $0xc] sm:$0xf]
    %v826 = vld [vmem:[%s821 + $0x10] sm:$0xf]
    %v827 = vld [vmem:[%s821 + $0x14] sm:$0xf]
    %v828 = vld [vmem:[%s821 + $0x18] sm:$0xf]
    %v829 = vld [vmem:[%s821 + $0x1c] sm:$0xf]
    %v830 = vld [vmem:[%s821 + $0x20] sm:$0xf]
    %v831 = vld [vmem:[%s821 + $0x24] sm:$0xf]
    %v832 = vld [vmem:[%s821 + $0x28] sm:$0xf]
    %v833 = vld [vmem:[%s821 + $0x2c] sm:$0xf]
    %v834 = vld [vmem:[%s821 + $0x30] sm:$0xf]
    %v835 = vld [vmem:[%s821 + $0x34] sm:$0xf]
    %v836 = vld [vmem:[%s821 + $0x38] sm:$0xf]
    %v837 = vld [vmem:[%s821 + $0x3c] sm:$0xf]
    %v838 = vunpack.c.l.bf16 %v822
    %v839 = vunpack.c.l.bf16 %v823
    %v840 = vunpack.c.l.bf16 %v824
    %v841 = vunpack.c.l.bf16 %v825
    %v842 = vunpack.c.l.bf16 %v826
    %v843 = vunpack.c.l.bf16 %v827
    %v844 = vunpack.c.l.bf16 %v828
    %v845 = vunpack.c.l.bf16 %v829
    %v846 = vunpack.c.l.bf16 %v830
    %v847 = vunpack.c.l.bf16 %v831
    %v848 = vunpack.c.l.bf16 %v832
    %v849 = vunpack.c.l.bf16 %v833
    %v850 = vunpack.c.l.bf16 %v834
    %v851 = vunpack.c.l.bf16 %v835
    %v852 = vunpack.c.l.bf16 %v836
    %v853 = vunpack.c.l.bf16 %v837
    %v854 = vlaneseq
    %v855 = vshrl.u32 %v854, 7
    %v856 = vsub.s32 1, %v855
    %v857 = vrot.slane %v810, %v856
    %858 = vmatprep.subr.mxu0 0.0
    %859 = vmatpush1.msra.mxu0 %v838
    %860 = vmatprep.subr.mxu0 0.0
    %861 = vmatpush1.msra.mxu0 %v839
    %862 = vmatprep.subr.mxu0 0.0
    %863 = vmatpush1.msra.mxu0 %v840
    %864 = vmatprep.subr.mxu0 0.0
    %865 = vmatpush1.msra.mxu0 %v841
    %866 = vmatprep.subr.mxu0 0.0
    %867 = vmatpush1.msra.mxu0 %v842
    %868 = vmatprep.subr.mxu0 0.0
    %869 = vmatpush1.msra.mxu0 %v843
    %870 = vmatprep.subr.mxu0 0.0
    %871 = vmatpush1.msra.mxu0 %v844
    %872 = vmatprep.subr.mxu0 0.0
    %873 = vmatpush1.msra.mxu0 %v845
    %874 = vmatprep.subr.mxu0 0.0
    %875 = vmatpush1.msra.mxu0 %v846
    %876 = vmatprep.subr.mxu0 0.0
    %877 = vmatpush1.msra.mxu0 %v847
    %878 = vmatprep.subr.mxu0 0.0
    %879 = vmatpush1.msra.mxu0 %v848
    %880 = vmatprep.subr.mxu0 0.0
    %881 = vmatpush1.msra.mxu0 %v849
    %882 = vmatprep.subr.mxu0 0.0
    %883 = vmatpush1.msra.mxu0 %v850
    %884 = vmatprep.subr.mxu0 0.0
    %885 = vmatpush1.msra.mxu0 %v851
    %886 = vmatprep.subr.mxu0 0.0
    %887 = vmatpush1.msra.mxu0 %v852
    %888 = vmatprep.subr.mxu0 0.0
    %889 = vmatpush1.msra.mxu0 %v853
    %890 = vmatprep.subr.mxu0 0.0
    %891 = vmatpush1.msra.mxu0 0.0
    %892 = vmatprep.subr.mxu0 0.0
    %893 = vmatpush1.msra.mxu0 0.0
    %894 = vmatprep.subr.mxu0 0.0
    %895 = vmatpush1.msra.mxu0 0.0
    %896 = vmatprep.subr.mxu0 0.0
    %897 = vmatpush1.msra.mxu0 0.0
    %898 = vmatprep.subr.mxu0 0.0
    %899 = vmatpush1.msra.mxu0 0.0
    %900 = vmatprep.subr.mxu0 0.0
    %901 = vmatpush1.msra.mxu0 0.0
    %902 = vmatprep.subr.mxu0 0.0
    %903 = vmatpush1.msra.mxu0 0.0
    %904 = vmatprep.subr.mxu0 0.0
    %905 = vmatpush1.msra.mxu0 0.0
    %906 = vmatprep.subr.mxu0 0.0
    %907 = vmatpush1.msra.mxu0 0.0
    %908 = vmatprep.subr.mxu0 0.0
    %909 = vmatpush1.msra.mxu0 0.0
    %910 = vmatprep.subr.mxu0 0.0
    %911 = vmatpush1.msra.mxu0 0.0
    %912 = vmatprep.subr.mxu0 0.0
    %913 = vmatpush1.msra.mxu0 0.0
    %914 = vmatprep.subr.mxu0 0.0
    %915 = vmatpush1.msra.mxu0 0.0
    %916 = vmatprep.subr.mxu0 0.0
    %917 = vmatpush1.msra.mxu0 0.0
    %918 = vmatprep.subr.mxu0 0.0
    %919 = vmatpush1.msra.mxu0 0.0
    %920 = vmatprep.subr.mxu0 0.0
    %921 = vmatpush1.msra.mxu0 0.0
    %922 = vmatprep.mubr.f32.mxu0 0.0
    %923 = vmatmul.mubr.f32.gmra.mrb[0].mxu0 %v820
    %v924 = vpop.f32.mrb[0].mxu0
    %v925 = vadd.f32 %v857, %v924
    %v926 = vpop.f32.mrb[0].mxu0
    %927 = vdwg.mxu0
    %v928 = vld [vmem:[%s2] sm:$0xff]
    %v929 = vlaneseq
    %v930 = vand.u32 %v929, 127
    %s931 = scalar_lea.vmem [#allocation4], 64
    %v932 = vld [vmem:[%s931] sm:$0xf]
    %v933 = vld [vmem:[%s931 + $0x4] sm:$0xf]
    %v934 = vld [vmem:[%s931 + $0x8] sm:$0xf]
    %v935 = vld [vmem:[%s931 + $0xc] sm:$0xf]
    %v936 = vld [vmem:[%s931 + $0x10] sm:$0xf]
    %v937 = vld [vmem:[%s931 + $0x14] sm:$0xf]
    %v938 = vld [vmem:[%s931 + $0x18] sm:$0xf]
    %v939 = vld [vmem:[%s931 + $0x1c] sm:$0xf]
    %v940 = vld [vmem:[%s931 + $0x20] sm:$0xf]
    %v941 = vld [vmem:[%s931 + $0x24] sm:$0xf]
    %v942 = vld [vmem:[%s931 + $0x28] sm:$0xf]
    %v943 = vld [vmem:[%s931 + $0x2c] sm:$0xf]
    %v944 = vld [vmem:[%s931 + $0x30] sm:$0xf]
    %v945 = vld [vmem:[%s931 + $0x34] sm:$0xf]
    %v946 = vld [vmem:[%s931 + $0x38] sm:$0xf]
    %v947 = vld [vmem:[%s931 + $0x3c] sm:$0xf]
    %v948 = vunpack.c.l.bf16 %v932
    %v949 = vunpack.c.l.bf16 %v933
    %v950 = vunpack.c.l.bf16 %v934
    %v951 = vunpack.c.l.bf16 %v935
    %v952 = vunpack.c.l.bf16 %v936
    %v953 = vunpack.c.l.bf16 %v937
    %v954 = vunpack.c.l.bf16 %v938
    %v955 = vunpack.c.l.bf16 %v939
    %v956 = vunpack.c.l.bf16 %v940
    %v957 = vunpack.c.l.bf16 %v941
    %v958 = vunpack.c.l.bf16 %v942
    %v959 = vunpack.c.l.bf16 %v943
    %v960 = vunpack.c.l.bf16 %v944
    %v961 = vunpack.c.l.bf16 %v945
    %v962 = vunpack.c.l.bf16 %v946
    %v963 = vunpack.c.l.bf16 %v947
    %s964 = scalar_lea.vmem [#allocation4], 128
    %v965 = vld [vmem:[%s964] sm:$0xf]
    %v966 = vld [vmem:[%s964 + $0x4] sm:$0xf]
    %v967 = vld [vmem:[%s964 + $0x8] sm:$0xf]
    %v968 = vld [vmem:[%s964 + $0xc] sm:$0xf]
    %v969 = vld [vmem:[%s964 + $0x10] sm:$0xf]
    %v970 = vld [vmem:[%s964 + $0x14] sm:$0xf]
    %v971 = vld [vmem:[%s964 + $0x18] sm:$0xf]
    %v972 = vld [vmem:[%s964 + $0x1c] sm:$0xf]
    %v973 = vld [vmem:[%s964 + $0x20] sm:$0xf]
    %v974 = vld [vmem:[%s964 + $0x24] sm:$0xf]
    %v975 = vld [vmem:[%s964 + $0x28] sm:$0xf]
    %v976 = vld [vmem:[%s964 + $0x2c] sm:$0xf]
    %v977 = vld [vmem:[%s964 + $0x30] sm:$0xf]
    %v978 = vld [vmem:[%s964 + $0x34] sm:$0xf]
    %v979 = vld [vmem:[%s964 + $0x38] sm:$0xf]
    %v980 = vld [vmem:[%s964 + $0x3c] sm:$0xf]
    %v981 = vunpack.c.l.bf16 %v965
    %v982 = vunpack.c.l.bf16 %v966
    %v983 = vunpack.c.l.bf16 %v967
    %v984 = vunpack.c.l.bf16 %v968
    %v985 = vunpack.c.l.bf16 %v969
    %v986 = vunpack.c.l.bf16 %v970
    %v987 = vunpack.c.l.bf16 %v971
    %v988 = vunpack.c.l.bf16 %v972
    %v989 = vunpack.c.l.bf16 %v973
    %v990 = vunpack.c.l.bf16 %v974
    %v991 = vunpack.c.l.bf16 %v975
    %v992 = vunpack.c.l.bf16 %v976
    %v993 = vunpack.c.l.bf16 %v977
    %v994 = vunpack.c.l.bf16 %v978
    %v995 = vunpack.c.l.bf16 %v979
    %v996 = vunpack.c.l.bf16 %v980
    %v997 = vlaneseq
    %v998 = vshrl.u32 %v997, 7
    %v999 = vsub.s32 2, %v998
    %v1000 = vrot.slane %v573, %v999
    %1001 = vmatprep.subr.mxu0 0.0
    %1002 = vmatpush1.msra.mxu0 %v948
    %1003 = vmatprep.subr.mxu0 0.0
    %1004 = vmatpush1.msra.mxu0 %v949
    %1005 = vmatprep.subr.mxu0 0.0
    %1006 = vmatpush1.msra.mxu0 %v950
    %1007 = vmatprep.subr.mxu0 0.0
    %1008 = vmatpush1.msra.mxu0 %v951
    %1009 = vmatprep.subr.mxu0 0.0
    %1010 = vmatpush1.msra.mxu0 %v952
    %1011 = vmatprep.subr.mxu0 0.0
    %1012 = vmatpush1.msra.mxu0 %v953
    %1013 = vmatprep.subr.mxu0 0.0
    %1014 = vmatpush1.msra.mxu0 %v954
    %1015 = vmatprep.subr.mxu0 0.0
    %1016 = vmatpush1.msra.mxu0 %v955
    %1017 = vmatprep.subr.mxu0 0.0
    %1018 = vmatpush1.msra.mxu0 %v956
    %1019 = vmatprep.subr.mxu0 0.0
    %1020 = vmatpush1.msra.mxu0 %v957
    %1021 = vmatprep.subr.mxu0 0.0
    %1022 = vmatpush1.msra.mxu0 %v958
    %1023 = vmatprep.subr.mxu0 0.0
    %1024 = vmatpush1.msra.mxu0 %v959
    %1025 = vmatprep.subr.mxu0 0.0
    %1026 = vmatpush1.msra.mxu0 %v960
    %1027 = vmatprep.subr.mxu0 0.0
    %1028 = vmatpush1.msra.mxu0 %v961
    %1029 = vmatprep.subr.mxu0 0.0
    %1030 = vmatpush1.msra.mxu0 %v962
    %1031 = vmatprep.subr.mxu0 0.0
    %1032 = vmatpush1.msra.mxu0 %v963
    %1033 = vmatprep.subr.mxu0 0.0
    %1034 = vmatpush1.msra.mxu0 0.0
    %1035 = vmatprep.subr.mxu0 0.0
    %1036 = vmatpush1.msra.mxu0 0.0
    %1037 = vmatprep.subr.mxu0 0.0
    %1038 = vmatpush1.msra.mxu0 0.0
    %1039 = vmatprep.subr.mxu0 0.0
    %1040 = vmatpush1.msra.mxu0 0.0
    %1041 = vmatprep.subr.mxu0 0.0
    %1042 = vmatpush1.msra.mxu0 0.0
    %1043 = vmatprep.subr.mxu0 0.0
    %1044 = vmatpush1.msra.mxu0 0.0
    %1045 = vmatprep.subr.mxu0 0.0
    %1046 = vmatpush1.msra.mxu0 0.0
    %1047 = vmatprep.subr.mxu0 0.0
    %1048 = vmatpush1.msra.mxu0 0.0
    %1049 = vmatprep.subr.mxu0 0.0
    %1050 = vmatpush1.msra.mxu0 0.0
    %1051 = vmatprep.subr.mxu0 0.0
    %1052 = vmatpush1.msra.mxu0 0.0
    %1053 = vmatprep.subr.mxu0 0.0
    %1054 = vmatpush1.msra.mxu0 0.0
    %1055 = vmatprep.subr.mxu0 0.0
    %1056 = vmatpush1.msra.mxu0 0.0
    %1057 = vmatprep.subr.mxu0 0.0
    %1058 = vmatpush1.msra.mxu0 0.0
    %1059 = vmatprep.subr.mxu0 0.0
    %1060 = vmatpush1.msra.mxu0 0.0
    %1061 = vmatprep.subr.mxu0 0.0
    %1062 = vmatpush1.msra.mxu0 0.0
    %1063 = vmatprep.subr.mxu0 0.0
    %1064 = vmatpush1.msra.mxu0 0.0
    %1065 = vmatprep.mubr.f32.mxu0 0.0
    %1066 = vmatmul.mubr.f32.gmra.mrb[0].mxu0 %v928
    %v1067 = vpop.f32.mrb[0].mxu0
    %v1068 = vadd.f32 %v1000, %v1067
    %v1069 = vpop.f32.mrb[0].mxu0
    %1070 = vdwg.mxu0
    %v1071 = vmul.f32 %v687, %v1068
    %v1072 = vmul.f32 %v1071, 0.5
    %v1073 = vtanh.pop %v1072
    %v1074 = vmul.f32 %v1073, 0.5
    %v1075 = vadd.f32 %v1074, 0.5
    %v1076 = vmul.f32 %v1071, %v1075
    %v1077 = vlaneseq
    %v1078 = vshrl.u32 %v1077, 7
    %v1079 = vsub.s32 3, %v1078
    %v1080 = vrot.slane %v573, %v1079
    %1081 = vmatprep.subr.mxu0 0.0
    %1082 = vmatpush1.msra.mxu0 %v981
    %1083 = vmatprep.subr.mxu0 0.0
    %1084 = vmatpush1.msra.mxu0 %v982
    %1085 = vmatprep.subr.mxu0 0.0
    %1086 = vmatpush1.msra.mxu0 %v983
    %1087 = vmatprep.subr.mxu0 0.0
    %1088 = vmatpush1.msra.mxu0 %v984
    %1089 = vmatprep.subr.mxu0 0.0
    %1090 = vmatpush1.msra.mxu0 %v985
    %1091 = vmatprep.subr.mxu0 0.0
    %1092 = vmatpush1.msra.mxu0 %v986
    %1093 = vmatprep.subr.mxu0 0.0
    %1094 = vmatpush1.msra.mxu0 %v987
    %1095 = vmatprep.subr.mxu0 0.0
    %1096 = vmatpush1.msra.mxu0 %v988
    %1097 = vmatprep.subr.mxu0 0.0
    %1098 = vmatpush1.msra.mxu0 %v989
    %1099 = vmatprep.subr.mxu0 0.0
    %1100 = vmatpush1.msra.mxu0 %v990
    %1101 = vmatprep.subr.mxu0 0.0
    %1102 = vmatpush1.msra.mxu0 %v991
    %1103 = vmatprep.subr.mxu0 0.0
    %1104 = vmatpush1.msra.mxu0 %v992
    %1105 = vmatprep.subr.mxu0 0.0
    %1106 = vmatpush1.msra.mxu0 %v993
    %1107 = vmatprep.subr.mxu0 0.0
    %1108 = vmatpush1.msra.mxu0 %v994
    %1109 = vmatprep.subr.mxu0 0.0
    %1110 = vmatpush1.msra.mxu0 %v995
    %1111 = vmatprep.subr.mxu0 0.0
    %1112 = vmatpush1.msra.mxu0 %v996
    %1113 = vmatprep.subr.mxu0 0.0
    %1114 = vmatpush1.msra.mxu0 0.0
    %1115 = vmatprep.subr.mxu0 0.0
    %1116 = vmatpush1.msra.mxu0 0.0
    %1117 = vmatprep.subr.mxu0 0.0
    %1118 = vmatpush1.msra.mxu0 0.0
    %1119 = vmatprep.subr.mxu0 0.0
    %1120 = vmatpush1.msra.mxu0 0.0
    %1121 = vmatprep.subr.mxu0 0.0
    %1122 = vmatpush1.msra.mxu0 0.0
    %1123 = vmatprep.subr.mxu0 0.0
    %1124 = vmatpush1.msra.mxu0 0.0
    %1125 = vmatprep.subr.mxu0 0.0
    %1126 = vmatpush1.msra.mxu0 0.0
    %1127 = vmatprep.subr.mxu0 0.0
    %1128 = vmatpush1.msra.mxu0 0.0
    %1129 = vmatprep.subr.mxu0 0.0
    %1130 = vmatpush1.msra.mxu0 0.0
    %1131 = vmatprep.subr.mxu0 0.0
    %1132 = vmatpush1.msra.mxu0 0.0
    %1133 = vmatprep.subr.mxu0 0.0
    %1134 = vmatpush1.msra.mxu0 0.0
    %1135 = vmatprep.subr.mxu0 0.0
    %1136 = vmatpush1.msra.mxu0 0.0
    %1137 = vmatprep.subr.mxu0 0.0
    %1138 = vmatpush1.msra.mxu0 0.0
    %1139 = vmatprep.subr.mxu0 0.0
    %1140 = vmatpush1.msra.mxu0 0.0
    %1141 = vmatprep.subr.mxu0 0.0
    %1142 = vmatpush1.msra.mxu0 0.0
    %1143 = vmatprep.subr.mxu0 0.0
    %1144 = vmatpush1.msra.mxu0 0.0
    %1145 = vmatprep.mubr.f32.mxu0 0.0
    %1146 = vmatmul.mubr.f32.gmra.mrb[0].mxu0 %v1076
    %v1147 = vpop.f32.mrb[0].mxu0
    %v1148 = vadd.f32 %v1080, %v1147
    %v1149 = vpop.f32.mrb[0].mxu0
    %1150 = vdwg.mxu0
    %vm1151 = vcmp.lt.s32.totalorder %v930, 16
    %v1152 = vsel %vm1151, 1, 0
    %v1153 = vcvt.s32.f32 %v1152
    %1154 = vadd.xlane.f32.xlu0 %v1148
    %v1155 = vpop.xlane.xlu0 %1154
    %v1156 = vmul.f32 %v1155, 0.0625
    %v1157 = vsub.f32 %v1148, %v1156
    %v1158 = vmul.f32 %v1157, %v1153
    %v1159 = vmul.f32 %v1158, %v1158
    %1160 = vadd.xlane.f32.xlu0 %v1159
    %v1161 = vpop.xlane.xlu0 %1160
    %v1162 = vmul.f32 %v1161, 0.0625
    %v1163 = vadd.f32 %v1162, 1e-05
    %v1164 = vrsqrt.pop %v1163
    %v1165 = vmul.f32 %v1158, %v1164
    %v1166 = vlaneseq
    %v1167 = vshrl.u32 %v1166, 7
    %v1168 = vsub.s32 4, %v1167
    %v1169 = vrot.slane %v573, %v1168
    %v1170 = vmul.f32 %v1165, %v1169
    %v1171 = vlaneseq
    %v1172 = vshrl.u32 %v1171, 7
    %v1173 = vsub.s32 5, %v1172
    %v1174 = vrot.slane %v573, %v1173
    %v1175 = vadd.f32 %v1170, %v1174
    %v1176 = vmul.f32 %v1175, 0.5
    %v1177 = vtanh.pop %v1176
    %v1178 = vmul.f32 %v1177, 0.5
    %v1179 = vadd.f32 %v1178, 0.5
    %v1180 = vmul.f32 %v1175, %v1179
    %s1181 = scalar_lea.vmem [#allocation4], 256
    %v1182 = vld [vmem:[%s1181] sm:$0xf]
    %v1183 = vld [vmem:[%s1181 + $0x4] sm:$0xf]
    %v1184 = vld [vmem:[%s1181 + $0x8] sm:$0xf]
    %v1185 = vld [vmem:[%s1181 + $0xc] sm:$0xf]
    %v1186 = vld [vmem:[%s1181 + $0x10] sm:$0xf]
    %v1187 = vld [vmem:[%s1181 + $0x14] sm:$0xf]
    %v1188 = vld [vmem:[%s1181 + $0x18] sm:$0xf]
    %v1189 = vld [vmem:[%s1181 + $0x1c] sm:$0xf]
    %v1190 = vld [vmem:[%s1181 + $0x20] sm:$0xf]
    %v1191 = vld [vmem:[%s1181 + $0x24] sm:$0xf]
    %v1192 = vld [vmem:[%s1181 + $0x28] sm:$0xf]
    %v1193 = vld [vmem:[%s1181 + $0x2c] sm:$0xf]
    %v1194 = vld [vmem:[%s1181 + $0x30] sm:$0xf]
    %v1195 = vld [vmem:[%s1181 + $0x34] sm:$0xf]
    %v1196 = vld [vmem:[%s1181 + $0x38] sm:$0xf]
    %v1197 = vld [vmem:[%s1181 + $0x3c] sm:$0xf]
    %v1198 = vunpack.c.l.bf16 %v1182
    %v1199 = vunpack.c.l.bf16 %v1183
    %v1200 = vunpack.c.l.bf16 %v1184
    %v1201 = vunpack.c.l.bf16 %v1185
    %v1202 = vunpack.c.l.bf16 %v1186
    %v1203 = vunpack.c.l.bf16 %v1187
    %v1204 = vunpack.c.l.bf16 %v1188
    %v1205 = vunpack.c.l.bf16 %v1189
    %v1206 = vunpack.c.l.bf16 %v1190
    %v1207 = vunpack.c.l.bf16 %v1191
    %v1208 = vunpack.c.l.bf16 %v1192
    %v1209 = vunpack.c.l.bf16 %v1193
    %v1210 = vunpack.c.l.bf16 %v1194
    %v1211 = vunpack.c.l.bf16 %v1195
    %v1212 = vunpack.c.l.bf16 %v1196
    %v1213 = vunpack.c.l.bf16 %v1197
    %s1214 = scalar_lea.vmem [#allocation4], 320
    %v1215 = vld [vmem:[%s1214] sm:$0xf]
    %v1216 = vld [vmem:[%s1214 + $0x4] sm:$0xf]
    %v1217 = vld [vmem:[%s1214 + $0x8] sm:$0xf]
    %v1218 = vld [vmem:[%s1214 + $0xc] sm:$0xf]
    %v1219 = vld [vmem:[%s1214 + $0x10] sm:$0xf]
    %v1220 = vld [vmem:[%s1214 + $0x14] sm:$0xf]
    %v1221 = vld [vmem:[%s1214 + $0x18] sm:$0xf]
    %v1222 = vld [vmem:[%s1214 + $0x1c] sm:$0xf]
    %v1223 = vld [vmem:[%s1214 + $0x20] sm:$0xf]
    %v1224 = vld [vmem:[%s1214 + $0x24] sm:$0xf]
    %v1225 = vld [vmem:[%s1214 + $0x28] sm:$0xf]
    %v1226 = vld [vmem:[%s1214 + $0x2c] sm:$0xf]
    %v1227 = vld [vmem:[%s1214 + $0x30] sm:$0xf]
    %v1228 = vld [vmem:[%s1214 + $0x34] sm:$0xf]
    %v1229 = vld [vmem:[%s1214 + $0x38] sm:$0xf]
    %v1230 = vld [vmem:[%s1214 + $0x3c] sm:$0xf]
    %v1231 = vunpack.c.l.bf16 %v1215
    %v1232 = vunpack.c.l.bf16 %v1216
    %v1233 = vunpack.c.l.bf16 %v1217
    %v1234 = vunpack.c.l.bf16 %v1218
    %v1235 = vunpack.c.l.bf16 %v1219
    %v1236 = vunpack.c.l.bf16 %v1220
    %v1237 = vunpack.c.l.bf16 %v1221
    %v1238 = vunpack.c.l.bf16 %v1222
    %v1239 = vunpack.c.l.bf16 %v1223
    %v1240 = vunpack.c.l.bf16 %v1224
    %v1241 = vunpack.c.l.bf16 %v1225
    %v1242 = vunpack.c.l.bf16 %v1226
    %v1243 = vunpack.c.l.bf16 %v1227
    %v1244 = vunpack.c.l.bf16 %v1228
    %v1245 = vunpack.c.l.bf16 %v1229
    %v1246 = vunpack.c.l.bf16 %v1230
    %v1247 = vlaneseq
    %v1248 = vshrl.u32 %v1247, 7
    %v1249 = vsub.s32 2, %v1248
    %v1250 = vrot.slane %v691, %v1249
    %1251 = vmatprep.subr.mxu0 0.0
    %1252 = vmatpush1.msra.mxu0 %v1198
    %1253 = vmatprep.subr.mxu0 0.0
    %1254 = vmatpush1.msra.mxu0 %v1199
    %1255 = vmatprep.subr.mxu0 0.0
    %1256 = vmatpush1.msra.mxu0 %v1200
    %1257 = vmatprep.subr.mxu0 0.0
    %1258 = vmatpush1.msra.mxu0 %v1201
    %1259 = vmatprep.subr.mxu0 0.0
    %1260 = vmatpush1.msra.mxu0 %v1202
    %1261 = vmatprep.subr.mxu0 0.0
    %1262 = vmatpush1.msra.mxu0 %v1203
    %1263 = vmatprep.subr.mxu0 0.0
    %1264 = vmatpush1.msra.mxu0 %v1204
    %1265 = vmatprep.subr.mxu0 0.0
    %1266 = vmatpush1.msra.mxu0 %v1205
    %1267 = vmatprep.subr.mxu0 0.0
    %1268 = vmatpush1.msra.mxu0 %v1206
    %1269 = vmatprep.subr.mxu0 0.0
    %1270 = vmatpush1.msra.mxu0 %v1207
    %1271 = vmatprep.subr.mxu0 0.0
    %1272 = vmatpush1.msra.mxu0 %v1208
    %1273 = vmatprep.subr.mxu0 0.0
    %1274 = vmatpush1.msra.mxu0 %v1209
    %1275 = vmatprep.subr.mxu0 0.0
    %1276 = vmatpush1.msra.mxu0 %v1210
    %1277 = vmatprep.subr.mxu0 0.0
    %1278 = vmatpush1.msra.mxu0 %v1211
    %1279 = vmatprep.subr.mxu0 0.0
    %1280 = vmatpush1.msra.mxu0 %v1212
    %1281 = vmatprep.subr.mxu0 0.0
    %1282 = vmatpush1.msra.mxu0 %v1213
    %1283 = vmatprep.subr.mxu0 0.0
    %1284 = vmatpush1.msra.mxu0 0.0
    %1285 = vmatprep.subr.mxu0 0.0
    %1286 = vmatpush1.msra.mxu0 0.0
    %1287 = vmatprep.subr.mxu0 0.0
    %1288 = vmatpush1.msra.mxu0 0.0
    %1289 = vmatprep.subr.mxu0 0.0
    %1290 = vmatpush1.msra.mxu0 0.0
    %1291 = vmatprep.subr.mxu0 0.0
    %1292 = vmatpush1.msra.mxu0 0.0
    %1293 = vmatprep.subr.mxu0 0.0
    %1294 = vmatpush1.msra.mxu0 0.0
    %1295 = vmatprep.subr.mxu0 0.0
    %1296 = vmatpush1.msra.mxu0 0.0
    %1297 = vmatprep.subr.mxu0 0.0
    %1298 = vmatpush1.msra.mxu0 0.0
    %1299 = vmatprep.subr.mxu0 0.0
    %1300 = vmatpush1.msra.mxu0 0.0
    %1301 = vmatprep.subr.mxu0 0.0
    %1302 = vmatpush1.msra.mxu0 0.0
    %1303 = vmatprep.subr.mxu0 0.0
    %1304 = vmatpush1.msra.mxu0 0.0
    %1305 = vmatprep.subr.mxu0 0.0
    %1306 = vmatpush1.msra.mxu0 0.0
    %1307 = vmatprep.subr.mxu0 0.0
    %1308 = vmatpush1.msra.mxu0 0.0
    %1309 = vmatprep.subr.mxu0 0.0
    %1310 = vmatpush1.msra.mxu0 0.0
    %1311 = vmatprep.subr.mxu0 0.0
    %1312 = vmatpush1.msra.mxu0 0.0
    %1313 = vmatprep.subr.mxu0 0.0
    %1314 = vmatpush1.msra.mxu0 0.0
    %1315 = vmatprep.mubr.f32.mxu0 0.0
    %1316 = vmatmul.mubr.f32.gmra.mrb[0].mxu0 %v1180
    %v1317 = vpop.f32.mrb[0].mxu0
    %v1318 = vadd.f32 %v1250, %v1317
    %v1319 = vpop.f32.mrb[0].mxu0
    %1320 = vdwg.mxu0
    %v1321 = vmul.f32 %v806, %v1318
    %v1322 = vmul.f32 %v1321, 0.5
    %v1323 = vtanh.pop %v1322
    %v1324 = vmul.f32 %v1323, 0.5
    %v1325 = vadd.f32 %v1324, 0.5
    %v1326 = vmul.f32 %v1321, %v1325
    %v1327 = vlaneseq
    %v1328 = vshrl.u32 %v1327, 7
    %v1329 = vsub.s32 3, %v1328
    %v1330 = vrot.slane %v691, %v1329
    %1331 = vmatprep.subr.mxu0 0.0
    %1332 = vmatpush1.msra.mxu0 %v1231
    %1333 = vmatprep.subr.mxu0 0.0
    %1334 = vmatpush1.msra.mxu0 %v1232
    %1335 = vmatprep.subr.mxu0 0.0
    %1336 = vmatpush1.msra.mxu0 %v1233
    %1337 = vmatprep.subr.mxu0 0.0
    %1338 = vmatpush1.msra.mxu0 %v1234
    %1339 = vmatprep.subr.mxu0 0.0
    %1340 = vmatpush1.msra.mxu0 %v1235
    %1341 = vmatprep.subr.mxu0 0.0
    %1342 = vmatpush1.msra.mxu0 %v1236
    %1343 = vmatprep.subr.mxu0 0.0
    %1344 = vmatpush1.msra.mxu0 %v1237
    %1345 = vmatprep.subr.mxu0 0.0
    %1346 = vmatpush1.msra.mxu0 %v1238
    %1347 = vmatprep.subr.mxu0 0.0
    %1348 = vmatpush1.msra.mxu0 %v1239
    %1349 = vmatprep.subr.mxu0 0.0
    %1350 = vmatpush1.msra.mxu0 %v1240
    %1351 = vmatprep.subr.mxu0 0.0
    %1352 = vmatpush1.msra.mxu0 %v1241
    %1353 = vmatprep.subr.mxu0 0.0
    %1354 = vmatpush1.msra.mxu0 %v1242
    %1355 = vmatprep.subr.mxu0 0.0
    %1356 = vmatpush1.msra.mxu0 %v1243
    %1357 = vmatprep.subr.mxu0 0.0
    %1358 = vmatpush1.msra.mxu0 %v1244
    %1359 = vmatprep.subr.mxu0 0.0
    %1360 = vmatpush1.msra.mxu0 %v1245
    %1361 = vmatprep.subr.mxu0 0.0
    %1362 = vmatpush1.msra.mxu0 %v1246
    %1363 = vmatprep.subr.mxu0 0.0
    %1364 = vmatpush1.msra.mxu0 0.0
    %1365 = vmatprep.subr.mxu0 0.0
    %1366 = vmatpush1.msra.mxu0 0.0
    %1367 = vmatprep.subr.mxu0 0.0
    %1368 = vmatpush1.msra.mxu0 0.0
    %1369 = vmatprep.subr.mxu0 0.0
    %1370 = vmatpush1.msra.mxu0 0.0
    %1371 = vmatprep.subr.mxu0 0.0
    %1372 = vmatpush1.msra.mxu0 0.0
    %1373 = vmatprep.subr.mxu0 0.0
    %1374 = vmatpush1.msra.mxu0 0.0
    %1375 = vmatprep.subr.mxu0 0.0
    %1376 = vmatpush1.msra.mxu0 0.0
    %1377 = vmatprep.subr.mxu0 0.0
    %1378 = vmatpush1.msra.mxu0 0.0
    %1379 = vmatprep.subr.mxu0 0.0
    %1380 = vmatpush1.msra.mxu0 0.0
    %1381 = vmatprep.subr.mxu0 0.0
    %1382 = vmatpush1.msra.mxu0 0.0
    %1383 = vmatprep.subr.mxu0 0.0
    %1384 = vmatpush1.msra.mxu0 0.0
    %1385 = vmatprep.subr.mxu0 0.0
    %1386 = vmatpush1.msra.mxu0 0.0
    %1387 = vmatprep.subr.mxu0 0.0
    %1388 = vmatpush1.msra.mxu0 0.0
    %1389 = vmatprep.subr.mxu0 0.0
    %1390 = vmatpush1.msra.mxu0 0.0
    %1391 = vmatprep.subr.mxu0 0.0
    %1392 = vmatpush1.msra.mxu0 0.0
    %1393 = vmatprep.subr.mxu0 0.0
    %1394 = vmatpush1.msra.mxu0 0.0
    %1395 = vmatprep.mubr.f32.mxu0 0.0
    %1396 = vmatmul.mubr.f32.gmra.mrb[0].mxu0 %v1326
    %v1397 = vpop.f32.mrb[0].mxu0
    %v1398 = vadd.f32 %v1330, %v1397
    %v1399 = vpop.f32.mrb[0].mxu0
    %1400 = vdwg.mxu0
    %1401 = vadd.xlane.f32.xlu0 %v1398
    %v1402 = vpop.xlane.xlu0 %1401
    %v1403 = vmul.f32 %v1402, 0.0625
    %v1404 = vsub.f32 %v1398, %v1403
    %v1405 = vmul.f32 %v1404, %v1153
    %v1406 = vmul.f32 %v1405, %v1405
    %1407 = vadd.xlane.f32.xlu0 %v1406
    %v1408 = vpop.xlane.xlu0 %1407
    %v1409 = vmul.f32 %v1408, 0.0625
    %v1410 = vadd.f32 %v1409, 1e-05
    %v1411 = vrsqrt.pop %v1410
    %v1412 = vmul.f32 %v1405, %v1411
    %v1413 = vlaneseq
    %v1414 = vshrl.u32 %v1413, 7
    %v1415 = vsub.s32 4, %v1414
    %v1416 = vrot.slane %v691, %v1415
    %v1417 = vmul.f32 %v1412, %v1416
    %v1418 = vlaneseq
    %v1419 = vshrl.u32 %v1418, 7
    %v1420 = vsub.s32 5, %v1419
    %v1421 = vrot.slane %v691, %v1420
    %v1422 = vadd.f32 %v1417, %v1421
    %v1423 = vmul.f32 %v1422, 0.5
    %v1424 = vtanh.pop %v1423
    %v1425 = vmul.f32 %v1424, 0.5
    %v1426 = vadd.f32 %v1425, 0.5
    %v1427 = vmul.f32 %v1422, %v1426
    %s1428 = scalar_lea.vmem [#allocation4], 448
    %v1429 = vld [vmem:[%s1428] sm:$0xf]
    %v1430 = vld [vmem:[%s1428 + $0x4] sm:$0xf]
    %v1431 = vld [vmem:[%s1428 + $0x8] sm:$0xf]
    %v1432 = vld [vmem:[%s1428 + $0xc] sm:$0xf]
    %v1433 = vld [vmem:[%s1428 + $0x10] sm:$0xf]
    %v1434 = vld [vmem:[%s1428 + $0x14] sm:$0xf]
    %v1435 = vld [vmem:[%s1428 + $0x18] sm:$0xf]
    %v1436 = vld [vmem:[%s1428 + $0x1c] sm:$0xf]
    %v1437 = vld [vmem:[%s1428 + $0x20] sm:$0xf]
    %v1438 = vld [vmem:[%s1428 + $0x24] sm:$0xf]
    %v1439 = vld [vmem:[%s1428 + $0x28] sm:$0xf]
    %v1440 = vld [vmem:[%s1428 + $0x2c] sm:$0xf]
    %v1441 = vld [vmem:[%s1428 + $0x30] sm:$0xf]
    %v1442 = vld [vmem:[%s1428 + $0x34] sm:$0xf]
    %v1443 = vld [vmem:[%s1428 + $0x38] sm:$0xf]
    %v1444 = vld [vmem:[%s1428 + $0x3c] sm:$0xf]
    %v1445 = vunpack.c.l.bf16 %v1429
    %v1446 = vunpack.c.l.bf16 %v1430
    %v1447 = vunpack.c.l.bf16 %v1431
    %v1448 = vunpack.c.l.bf16 %v1432
    %v1449 = vunpack.c.l.bf16 %v1433
    %v1450 = vunpack.c.l.bf16 %v1434
    %v1451 = vunpack.c.l.bf16 %v1435
    %v1452 = vunpack.c.l.bf16 %v1436
    %v1453 = vunpack.c.l.bf16 %v1437
    %v1454 = vunpack.c.l.bf16 %v1438
    %v1455 = vunpack.c.l.bf16 %v1439
    %v1456 = vunpack.c.l.bf16 %v1440
    %v1457 = vunpack.c.l.bf16 %v1441
    %v1458 = vunpack.c.l.bf16 %v1442
    %v1459 = vunpack.c.l.bf16 %v1443
    %v1460 = vunpack.c.l.bf16 %v1444
    %s1461 = scalar_lea.vmem [#allocation4], 512
    %v1462 = vld [vmem:[%s1461] sm:$0xf]
    %v1463 = vld [vmem:[%s1461 + $0x4] sm:$0xf]
    %v1464 = vld [vmem:[%s1461 + $0x8] sm:$0xf]
    %v1465 = vld [vmem:[%s1461 + $0xc] sm:$0xf]
    %v1466 = vld [vmem:[%s1461 + $0x10] sm:$0xf]
    %v1467 = vld [vmem:[%s1461 + $0x14] sm:$0xf]
    %v1468 = vld [vmem:[%s1461 + $0x18] sm:$0xf]
    %v1469 = vld [vmem:[%s1461 + $0x1c] sm:$0xf]
    %v1470 = vld [vmem:[%s1461 + $0x20] sm:$0xf]
    %v1471 = vld [vmem:[%s1461 + $0x24] sm:$0xf]
    %v1472 = vld [vmem:[%s1461 + $0x28] sm:$0xf]
    %v1473 = vld [vmem:[%s1461 + $0x2c] sm:$0xf]
    %v1474 = vld [vmem:[%s1461 + $0x30] sm:$0xf]
    %v1475 = vld [vmem:[%s1461 + $0x34] sm:$0xf]
    %v1476 = vld [vmem:[%s1461 + $0x38] sm:$0xf]
    %v1477 = vld [vmem:[%s1461 + $0x3c] sm:$0xf]
    %v1478 = vunpack.c.l.bf16 %v1462
    %v1479 = vunpack.c.l.bf16 %v1463
    %v1480 = vunpack.c.l.bf16 %v1464
    %v1481 = vunpack.c.l.bf16 %v1465
    %v1482 = vunpack.c.l.bf16 %v1466
    %v1483 = vunpack.c.l.bf16 %v1467
    %v1484 = vunpack.c.l.bf16 %v1468
    %v1485 = vunpack.c.l.bf16 %v1469
    %v1486 = vunpack.c.l.bf16 %v1470
    %v1487 = vunpack.c.l.bf16 %v1471
    %v1488 = vunpack.c.l.bf16 %v1472
    %v1489 = vunpack.c.l.bf16 %v1473
    %v1490 = vunpack.c.l.bf16 %v1474
    %v1491 = vunpack.c.l.bf16 %v1475
    %v1492 = vunpack.c.l.bf16 %v1476
    %v1493 = vunpack.c.l.bf16 %v1477
    %v1494 = vlaneseq
    %v1495 = vshrl.u32 %v1494, 7
    %v1496 = vsub.s32 2, %v1495
    %v1497 = vrot.slane %v810, %v1496
    %1498 = vmatprep.subr.mxu0 0.0
    %1499 = vmatpush1.msra.mxu0 %v1445
    %1500 = vmatprep.subr.mxu0 0.0
    %1501 = vmatpush1.msra.mxu0 %v1446
    %1502 = vmatprep.subr.mxu0 0.0
    %1503 = vmatpush1.msra.mxu0 %v1447
    %1504 = vmatprep.subr.mxu0 0.0
    %1505 = vmatpush1.msra.mxu0 %v1448
    %1506 = vmatprep.subr.mxu0 0.0
    %1507 = vmatpush1.msra.mxu0 %v1449
    %1508 = vmatprep.subr.mxu0 0.0
    %1509 = vmatpush1.msra.mxu0 %v1450
    %1510 = vmatprep.subr.mxu0 0.0
    %1511 = vmatpush1.msra.mxu0 %v1451
    %1512 = vmatprep.subr.mxu0 0.0
    %1513 = vmatpush1.msra.mxu0 %v1452
    %1514 = vmatprep.subr.mxu0 0.0
    %1515 = vmatpush1.msra.mxu0 %v1453
    %1516 = vmatprep.subr.mxu0 0.0
    %1517 = vmatpush1.msra.mxu0 %v1454
    %1518 = vmatprep.subr.mxu0 0.0
    %1519 = vmatpush1.msra.mxu0 %v1455
    %1520 = vmatprep.subr.mxu0 0.0
    %1521 = vmatpush1.msra.mxu0 %v1456
    %1522 = vmatprep.subr.mxu0 0.0
    %1523 = vmatpush1.msra.mxu0 %v1457
    %1524 = vmatprep.subr.mxu0 0.0
    %1525 = vmatpush1.msra.mxu0 %v1458
    %1526 = vmatprep.subr.mxu0 0.0
    %1527 = vmatpush1.msra.mxu0 %v1459
    %1528 = vmatprep.subr.mxu0 0.0
    %1529 = vmatpush1.msra.mxu0 %v1460
    %1530 = vmatprep.subr.mxu0 0.0
    %1531 = vmatpush1.msra.mxu0 0.0
    %1532 = vmatprep.subr.mxu0 0.0
    %1533 = vmatpush1.msra.mxu0 0.0
    %1534 = vmatprep.subr.mxu0 0.0
    %1535 = vmatpush1.msra.mxu0 0.0
    %1536 = vmatprep.subr.mxu0 0.0
    %1537 = vmatpush1.msra.mxu0 0.0
    %1538 = vmatprep.subr.mxu0 0.0
    %1539 = vmatpush1.msra.mxu0 0.0
    %1540 = vmatprep.subr.mxu0 0.0
    %1541 = vmatpush1.msra.mxu0 0.0
    %1542 = vmatprep.subr.mxu0 0.0
    %1543 = vmatpush1.msra.mxu0 0.0
    %1544 = vmatprep.subr.mxu0 0.0
    %1545 = vmatpush1.msra.mxu0 0.0
    %1546 = vmatprep.subr.mxu0 0.0
    %1547 = vmatpush1.msra.mxu0 0.0
    %1548 = vmatprep.subr.mxu0 0.0
    %1549 = vmatpush1.msra.mxu0 0.0
    %1550 = vmatprep.subr.mxu0 0.0
    %1551 = vmatpush1.msra.mxu0 0.0
    %1552 = vmatprep.subr.mxu0 0.0
    %1553 = vmatpush1.msra.mxu0 0.0
    %1554 = vmatprep.subr.mxu0 0.0
    %1555 = vmatpush1.msra.mxu0 0.0
    %1556 = vmatprep.subr.mxu0 0.0
    %1557 = vmatpush1.msra.mxu0 0.0
    %1558 = vmatprep.subr.mxu0 0.0
    %1559 = vmatpush1.msra.mxu0 0.0
    %1560 = vmatprep.subr.mxu0 0.0
    %1561 = vmatpush1.msra.mxu0 0.0
    %1562 = vmatprep.mubr.f32.mxu0 0.0
    %1563 = vmatmul.mubr.f32.gmra.mrb[0].mxu0 %v1427
    %v1564 = vpop.f32.mrb[0].mxu0
    %v1565 = vadd.f32 %v1497, %v1564
    %v1566 = vpop.f32.mrb[0].mxu0
    %1567 = vdwg.mxu0
    %v1568 = vmul.f32 %v925, %v1565
    %v1569 = vmul.f32 %v1568, 0.5
    %v1570 = vtanh.pop %v1569
    %v1571 = vmul.f32 %v1570, 0.5
    %v1572 = vadd.f32 %v1571, 0.5
    %v1573 = vmul.f32 %v1568, %v1572
    %v1574 = vlaneseq
    %v1575 = vshrl.u32 %v1574, 7
    %v1576 = vsub.s32 3, %v1575
    %v1577 = vrot.slane %v810, %v1576
    %1578 = vmatprep.subr.mxu0 0.0
    %1579 = vmatpush1.msra.mxu0 %v1478
    %1580 = vmatprep.subr.mxu0 0.0
    %1581 = vmatpush1.msra.mxu0 %v1479
    %1582 = vmatprep.subr.mxu0 0.0
    %1583 = vmatpush1.msra.mxu0 %v1480
    %1584 = vmatprep.subr.mxu0 0.0
    %1585 = vmatpush1.msra.mxu0 %v1481
    %1586 = vmatprep.subr.mxu0 0.0
    %1587 = vmatpush1.msra.mxu0 %v1482
    %1588 = vmatprep.subr.mxu0 0.0
    %1589 = vmatpush1.msra.mxu0 %v1483
    %1590 = vmatprep.subr.mxu0 0.0
    %1591 = vmatpush1.msra.mxu0 %v1484
    %1592 = vmatprep.subr.mxu0 0.0
    %1593 = vmatpush1.msra.mxu0 %v1485
    %1594 = vmatprep.subr.mxu0 0.0
    %1595 = vmatpush1.msra.mxu0 %v1486
    %1596 = vmatprep.subr.mxu0 0.0
    %1597 = vmatpush1.msra.mxu0 %v1487
    %1598 = vmatprep.subr.mxu0 0.0
    %1599 = vmatpush1.msra.mxu0 %v1488
    %1600 = vmatprep.subr.mxu0 0.0
    %1601 = vmatpush1.msra.mxu0 %v1489
    %1602 = vmatprep.subr.mxu0 0.0
    %1603 = vmatpush1.msra.mxu0 %v1490
    %1604 = vmatprep.subr.mxu0 0.0
    %1605 = vmatpush1.msra.mxu0 %v1491
    %1606 = vmatprep.subr.mxu0 0.0
    %1607 = vmatpush1.msra.mxu0 %v1492
    %1608 = vmatprep.subr.mxu0 0.0
    %1609 = vmatpush1.msra.mxu0 %v1493
    %1610 = vmatprep.subr.mxu0 0.0
    %1611 = vmatpush1.msra.mxu0 0.0
    %1612 = vmatprep.subr.mxu0 0.0
    %1613 = vmatpush1.msra.mxu0 0.0
    %1614 = vmatprep.subr.mxu0 0.0
    %1615 = vmatpush1.msra.mxu0 0.0
    %1616 = vmatprep.subr.mxu0 0.0
    %1617 = vmatpush1.msra.mxu0 0.0
    %1618 = vmatprep.subr.mxu0 0.0
    %1619 = vmatpush1.msra.mxu0 0.0
    %1620 = vmatprep.subr.mxu0 0.0
    %1621 = vmatpush1.msra.mxu0 0.0
    %1622 = vmatprep.subr.mxu0 0.0
    %1623 = vmatpush1.msra.mxu0 0.0
    %1624 = vmatprep.subr.mxu0 0.0
    %1625 = vmatpush1.msra.mxu0 0.0
    %1626 = vmatprep.subr.mxu0 0.0
    %1627 = vmatpush1.msra.mxu0 0.0
    %1628 = vmatprep.subr.mxu0 0.0
    %1629 = vmatpush1.msra.mxu0 0.0
    %1630 = vmatprep.subr.mxu0 0.0
    %1631 = vmatpush1.msra.mxu0 0.0
    %1632 = vmatprep.subr.mxu0 0.0
    %1633 = vmatpush1.msra.mxu0 0.0
    %1634 = vmatprep.subr.mxu0 0.0
    %1635 = vmatpush1.msra.mxu0 0.0
    %1636 = vmatprep.subr.mxu0 0.0
    %1637 = vmatpush1.msra.mxu0 0.0
    %1638 = vmatprep.subr.mxu0 0.0
    %1639 = vmatpush1.msra.mxu0 0.0
    %1640 = vmatprep.subr.mxu0 0.0
    %1641 = vmatpush1.msra.mxu0 0.0
    %1642 = vmatprep.mubr.f32.mxu0 0.0
    %1643 = vmatmul.mubr.f32.gmra.mrb[0].mxu0 %v1573
    %v1644 = vpop.f32.mrb[0].mxu0
    %v1645 = vadd.f32 %v1577, %v1644
    %v1646 = vpop.f32.mrb[0].mxu0
    %1647 = vdwg.mxu0
    %1648 = vst [vmem:[%s6] sm:$0xff] %v1645
    // Predicated region
    $region34: #{simple_net_forward.1} parent=1 // pred_check
      _
    $region35: #{simple_net_forward.1} parent=1 // pred_check_branch
      %1650 = sbr.rel (0) target = $region37
    $region36: #{simple_net_forward.1} parent=1 // pred_region
      _
    $region37: #{simple_net_forward.1} parent=1 // pred_fallthru
      _
    // Predicated region
    $region38: #{simple_net_forward.1} parent=1 // pred_check
      _
    $region39: #{simple_net_forward.1} parent=1 // pred_check_branch
      %1652 = sbr.rel (0) target = $region41
    $region40: #{simple_net_forward.1} parent=1 // pred_region
      _
    $region41: #{simple_net_forward.1} parent=1 // pred_fallthru
      _
    %1653 = vsyncpa [#allocation3], 1
    %1654 = vsyncpa [#allocation5], 1

</llo_original>
